<compile_context>
chip_gen: v5e
topology: v5e:2x2
jax: 0.10.0
libtpu: 0.0.40
codegen_flags: <defaults>
</compile_context>

<pallas_src>
import jax
import jax.numpy as jnp
import numpy as np
from jax import lax
from jax.experimental import pallas as pl
from jax.experimental.pallas import tpu as pltpu


# ---------------------------------------------------------------------------
# Pallas kernel: full biLSTM recurrence + fused FC epilogue in one invocation.
# ---------------------------------------------------------------------------
def _bilstm_fc_kernel(len_ref, gx_ref, whh_ref, h0_ref, c0_ref, wfc_ref, bfc_ref,
                      out_ref, outf_ref, outb_ref):
    T, B, G = gx_ref.shape          # G = 8*H (gate-major, direction-minor layout)
    H = G // 8

    # --- loop-invariant setup (hoisted) ---
    lens = jnp.broadcast_to(len_ref[...], (B, 2 * H))            # (B, 2H) int32
    lane2 = lax.broadcasted_iota(jnp.int32, (B, 2 * H), 1)
    fwd_half = lane2 < H                                          # first H lanes = fwd dir
    t_base = jnp.where(fwd_half, 0, T - 1)                        # fwd compares t, bwd T-1-t
    t_sign = jnp.where(fwd_half, 1, -1)
    lane8 = lax.broadcasted_iota(jnp.int32, (B, G), 1)
    g_lanes = (lane8 >= 4 * H) & (lane8 < 6 * H)                  # g-gate lanes (tanh)

    whh = whh_ref[...]                                            # (2H, 8H) resident

    def step(t, carry):
        h, c = carry                                              # (B, 2H) each, [fwd | bwd]
        # one fused recurrent matmul for both directions; x-projection is precomputed.
        gates = jnp.dot(h, whh, preferred_element_type=jnp.float32) + gx_ref[t]  # (B, 8H)
        # full-width nonlinearities + lane select (gate order: i, f, g, o; dir-minor)
        act = jnp.where(g_lanes, jnp.tanh(gates), jax.nn.sigmoid(gates))
        i_g = act[:, 0 * 2 * H:1 * 2 * H]
        f_g = act[:, 1 * 2 * H:2 * 2 * H]
        g_g = act[:, 2 * 2 * H:3 * 2 * H]
        o_g = act[:, 3 * 2 * H:4 * 2 * H]
        c_new = f_g * c + i_g * g_g
        h_new = o_g * jnp.tanh(c_new)

        # length masking: fwd lanes active while t < len[b], bwd lanes while T-1-t < len[b]
        m = (t_base + t * t_sign) < lens                          # (B, 2H) bool
        h = jnp.where(m, h_new, h)
        c = jnp.where(m, c_new, c)
        out_m = jnp.where(m, h_new, 0.0)

        # stash per-step outputs in VMEM scratch (forward at t, backward at T-1-t)
        sf = pl.multiple_of(t * B, B)
        sb = pl.multiple_of((T - 1 - t) * B, B)
        outf_ref[pl.ds(sf, B), :] = out_m[:, 0:H]
        outb_ref[pl.ds(sb, B), :] = out_m[:, H:2 * H]
        return h, c

    lax.fori_loop(0, T, step, (h0_ref[...], c0_ref[...]), unroll=True)

    # --- fused FC epilogue: (T*B, 2H) @ (2H, Lp) with lane-dense (128-wide) output ---
    wfc = wfc_ref[...]                                            # (2H, Lp)
    logits = (jnp.dot(outf_ref[...], wfc[0:H, :], preferred_element_type=jnp.float32)
              + jnp.dot(outb_ref[...], wfc[H:2 * H, :], preferred_element_type=jnp.float32)
              + bfc_ref[...])
    out_ref[...] = logits                                         # (T*B, Lp)


# ---------------------------------------------------------------------------
# Wrapper
# ---------------------------------------------------------------------------
@jax.jit
def lstm_forward(tokens, lengths, params):
    """tokens: (B, T) int32; lengths: (B,) int32. Returns logits (B, T, L) float32."""
    emb_tbl = params["emb"]
    B, T = tokens.shape
    H = params["h0"].shape[-1]
    L = params["b_fc"].shape[-1]
    LP = 128  # lane-dense padded label dim (sliced back to L below)

    # --- glue (XLA): hoist input projection into the embedding table, then gather ---
    # dropout(identity, eval) on the embedding commutes with the projection.
    proj_f = emb_tbl @ params["wih_f"] + params["b_f"]            # (V, 4H)
    proj_b = emb_tbl @ params["wih_b"] + params["b_b"]            # (V, 4H)
    gx_f = jnp.transpose(jnp.take(proj_f, tokens, axis=0), (1, 0, 2))          # (T, B, 4H)
    gx_b = jnp.transpose(jnp.take(proj_b, tokens, axis=0), (1, 0, 2))[::-1]    # time-reversed
    # gate-major, direction-minor lane layout: [i_f i_b | f_f f_b | g_f g_b | o_f o_b]
    gx = jnp.concatenate([gx_f.reshape(T, B, 4, H),
                          gx_b.reshape(T, B, 4, H)], axis=-1).reshape(T, B, 8 * H)

    # block-diagonal recurrent weight in the same gate-major layout: (2H, 8H)
    wf = params["whh_f"].reshape(H, 4, H)
    wb = params["whh_b"].reshape(H, 4, H)
    z = jnp.zeros_like(wf)
    whh_bd = jnp.concatenate([jnp.concatenate([wf, z], axis=-1),
                              jnp.concatenate([z, wb], axis=-1)], axis=0).reshape(2 * H, 8 * H)

    h0c = jnp.concatenate([params["h0"][0], params["h0"][1]], axis=-1)   # (B, 2H)
    c0c = jnp.concatenate([params["c0"][0], params["c0"][1]], axis=-1)   # (B, 2H)

    wfc_pad = jnp.zeros((2 * H, LP), jnp.float32).at[:, :L].set(params["w_fc"])
    bfc_pad = jnp.zeros((1, LP), jnp.float32).at[:, :L].set(params["b_fc"])

    lens2d = lengths.astype(jnp.int32).reshape(B, 1)

    logits_pad = pl.pallas_call(
        _bilstm_fc_kernel,
        out_shape=jax.ShapeDtypeStruct((T * B, LP), jnp.float32),
        grid_spec=pltpu.PrefetchScalarGridSpec(
            num_scalar_prefetch=0,
            grid=(1,),
            in_specs=[
                pl.BlockSpec((B, 1), lambda i: (0, 0)),                 # lengths
                pl.BlockSpec((T, B, 8 * H), lambda i: (0, 0, 0)),       # gate pre-activations
                pl.BlockSpec((2 * H, 8 * H), lambda i: (0, 0)),         # block-diag W_hh
                pl.BlockSpec((B, 2 * H), lambda i: (0, 0)),             # h0 [fwd|bwd]
                pl.BlockSpec((B, 2 * H), lambda i: (0, 0)),             # c0 [fwd|bwd]
                pl.BlockSpec((2 * H, LP), lambda i: (0, 0)),            # FC weight (padded)
                pl.BlockSpec((1, LP), lambda i: (0, 0)),                # FC bias (padded)
            ],
            out_specs=pl.BlockSpec((T * B, LP), lambda i: (0, 0)),
            scratch_shapes=[pltpu.VMEM((T * B, H), jnp.float32),        # fwd outputs
                            pltpu.VMEM((T * B, H), jnp.float32)],       # bwd outputs
        ),
        compiler_params=pltpu.CompilerParams(dimension_semantics=("arbitrary",)),
    )(lens2d, gx, whh_bd, h0c, c0c, wfc_pad, bfc_pad)

    # (T*B, LP) -> (B, T, L) batch_first
    logits = logits_pad.reshape(T, B, LP)[:, :, :L].transpose(1, 0, 2)
    return logits


# ---------------------------------------------------------------------------
# Pure-JAX reference (for correctness check)
# ---------------------------------------------------------------------------
def ref_forward(tokens, lengths, params):
    emb = params["emb"][tokens]                            # (B, T, E)
    B, T, _ = emb.shape
    H = params["h0"].shape[-1]

    def cell(x, h, c, wih, whh, b):
        g = x @ wih + h @ whh + b
        i, f, gg, o = jnp.split(g, 4, axis=-1)
        i, f, gg, o = jax.nn.sigmoid(i), jax.nn.sigmoid(f), jnp.tanh(gg), jax.nn.sigmoid(o)
        c_new = f * c + i * gg
        return o * jnp.tanh(c_new), c_new

    # forward direction
    h, c = params["h0"][0], params["c0"][0]
    outs_f = []
    for t in range(T):
        h_new, c_new = cell(emb[:, t], h, c, params["wih_f"], params["whh_f"], params["b_f"])
        m = (t < lengths)[:, None]
        h = jnp.where(m, h_new, h)
        c = jnp.where(m, c_new, c)
        outs_f.append(jnp.where(m, h_new, 0.0))
    out_f = jnp.stack(outs_f, axis=1)                      # (B, T, H)

    # backward direction
    h, c = params["h0"][1], params["c0"][1]
    outs_b = [None] * T
    for t in range(T - 1, -1, -1):
        h_new, c_new = cell(emb[:, t], h, c, params["wih_b"], params["whh_b"], params["b_b"])
        m = (t < lengths)[:, None]
        h = jnp.where(m, h_new, h)
        c = jnp.where(m, c_new, c)
        outs_b[t] = jnp.where(m, h_new, 0.0)
    out_b = jnp.stack(outs_b, axis=1)                      # (B, T, H)

    out = jnp.concatenate([out_f, out_b], axis=-1)         # (B, T, 2H)
    return out @ params["w_fc"] + params["b_fc"]           # (B, T, L)


# ---------------------------------------------------------------------------
# Main
# ---------------------------------------------------------------------------
if __name__ == "__main__":
    V, E, H, B, T, L = 20, 32, 32, 8, 8, 6   # vocab, embed, hidden, batch, seq, labels

    key = jax.random.PRNGKey(0)
    ks = jax.random.split(key, 16)
    s = 0.1
    params = {
        "emb":   jax.random.normal(ks[0], (V, E), jnp.float32),
        "wih_f": s * jax.random.normal(ks[1], (E, 4 * H), jnp.float32),
        "whh_f": s * jax.random.normal(ks[2], (H, 4 * H), jnp.float32),
        "b_f":   s * jax.random.normal(ks[3], (1, 4 * H), jnp.float32),
        "wih_b": s * jax.random.normal(ks[4], (E, 4 * H), jnp.float32),
        "whh_b": s * jax.random.normal(ks[5], (H, 4 * H), jnp.float32),
        "b_b":   s * jax.random.normal(ks[6], (1, 4 * H), jnp.float32),
        "h0":    jax.random.normal(ks[7], (2, B, H), jnp.float32),   # torch.randn h_0
        "c0":    jax.random.normal(ks[8], (2, B, H), jnp.float32),   # torch.randn c_0
        "w_fc":  s * jax.random.normal(ks[9], (2 * H, L), jnp.float32),
        "b_fc":  s * jax.random.normal(ks[10], (1, L), jnp.float32),
    }

    tokens = jax.random.randint(ks[11], (B, T), 0, V, dtype=jnp.int32)
    lengths = jnp.array([8, 7, 6, 5, 4, 3, 2, 8], dtype=jnp.int32)   # max length == T

    logits = lstm_forward(tokens, lengths, params)
    logits = jax.block_until_ready(logits)

    ref = ref_forward(tokens, lengths, params)
    np.testing.assert_allclose(np.asarray(logits), np.asarray(ref), rtol=1e-4, atol=1e-4)

    assert logits.shape == (B, T, L)
    print("KERNEL_OK")
</pallas_src>

<mosaic_0001>
module attributes {stable_mosaic.version = 11 : i64} {
  func.func @_bilstm_fc_kernel(%arg0: i32, %arg1: memref<8x1xi32, #tpu.memory_space<vmem>>, %arg2: memref<8x8x256xf32, #tpu.memory_space<vmem>>, %arg3: memref<64x256xf32, #tpu.memory_space<vmem>>, %arg4: memref<8x64xf32, #tpu.memory_space<vmem>>, %arg5: memref<8x64xf32, #tpu.memory_space<vmem>>, %arg6: memref<64x128xf32, #tpu.memory_space<vmem>>, %arg7: memref<1x128xf32, #tpu.memory_space<vmem>>, %arg8: memref<64x128xf32, #tpu.memory_space<vmem>>, %arg9: memref<64x32xf32, #tpu.memory_space<vmem>>, %arg10: memref<64x32xf32, #tpu.memory_space<vmem>>) attributes {dimension_semantics = [#tpu.dimension_semantics<arbitrary>], iteration_bounds = array<i64: 1>, scalar_prefetch = 0 : i64, scratch_operands = 2 : i64, tpu.core_type = #tpu.core_type<tc>, window_params = [{pipeline_mode = #tpu.pipeline_mode<synchronous>, transform_indices = @transform_0, window_bounds = array<i64: 8, 1>}, {pipeline_mode = #tpu.pipeline_mode<synchronous>, transform_indices = @transform_1, window_bounds = array<i64: 8, 8, 256>}, {pipeline_mode = #tpu.pipeline_mode<synchronous>, transform_indices = @transform_2, window_bounds = array<i64: 64, 256>}, {pipeline_mode = #tpu.pipeline_mode<synchronous>, transform_indices = @transform_3, window_bounds = array<i64: 8, 64>}, {pipeline_mode = #tpu.pipeline_mode<synchronous>, transform_indices = @transform_4, window_bounds = array<i64: 8, 64>}, {pipeline_mode = #tpu.pipeline_mode<synchronous>, transform_indices = @transform_5, window_bounds = array<i64: 64, 128>}, {pipeline_mode = #tpu.pipeline_mode<synchronous>, transform_indices = @transform_6, window_bounds = array<i64: 1, 128>}, {pipeline_mode = #tpu.pipeline_mode<synchronous>, transform_indices = @transform_7, window_bounds = array<i64: 64, 128>}]} {
    %c0 = arith.constant 0 : index
    %c0_0 = arith.constant 0 : index
    %0 = vector.load %arg1[%c0, %c0_0] : memref<8x1xi32, #tpu.memory_space<vmem>>, vector<8x1xi32>
    %1 = vector.shape_cast %0 : vector<8x1xi32> to vector<8x1xi32>
    %2 = vector.broadcast %1 : vector<8x1xi32> to vector<8x64xi32>
    %3 = tpu.iota {dimensions = array<i32: 1>} : vector<8x64xi32>
    %c32_i32 = arith.constant 32 : i32
    %4 = vector.broadcast %c32_i32 : i32 to vector<8x64xi32>
    %5 = arith.cmpi slt, %3, %4 : vector<8x64xi32>
    %c0_i32 = arith.constant 0 : i32
    %c7_i32 = arith.constant 7 : i32
    %6 = vector.broadcast %c0_i32 : i32 to vector<8x64xi32>
    %7 = vector.broadcast %c7_i32 : i32 to vector<8x64xi32>
    %8 = arith.select %5, %6, %7 : vector<8x64xi1>, vector<8x64xi32>
    %c1_i32 = arith.constant 1 : i32
    %c-1_i32 = arith.constant -1 : i32
    %9 = vector.broadcast %c1_i32 : i32 to vector<8x64xi32>
    %10 = vector.broadcast %c-1_i32 : i32 to vector<8x64xi32>
    %11 = arith.select %5, %9, %10 : vector<8x64xi1>, vector<8x64xi32>
    %12 = tpu.iota {dimensions = array<i32: 1>} : vector<8x256xi32>
    %c128_i32 = arith.constant 128 : i32
    %13 = vector.broadcast %c128_i32 : i32 to vector<8x256xi32>
    %14 = arith.cmpi sge, %12, %13 : vector<8x256xi32>
    %c192_i32 = arith.constant 192 : i32
    %15 = vector.broadcast %c192_i32 : i32 to vector<8x256xi32>
    %16 = arith.cmpi slt, %12, %15 : vector<8x256xi32>
    %17 = arith.andi %14, %16 : vector<8x256xi1>
    %c0_1 = arith.constant 0 : index
    %c0_2 = arith.constant 0 : index
    %18 = vector.load %arg3[%c0_1, %c0_2] : memref<64x256xf32, #tpu.memory_space<vmem>>, vector<64x256xf32>
    %c0_3 = arith.constant 0 : index
    %c0_4 = arith.constant 0 : index
    %19 = vector.load %arg4[%c0_3, %c0_4] : memref<8x64xf32, #tpu.memory_space<vmem>>, vector<8x64xf32>
    %c0_5 = arith.constant 0 : index
    %c0_6 = arith.constant 0 : index
    %20 = vector.load %arg5[%c0_5, %c0_6] : memref<8x64xf32, #tpu.memory_space<vmem>>, vector<8x64xf32>
    %c0_i32_7 = arith.constant 0 : i32
    %cst = arith.constant dense<0.000000e+00> : vector<8x256xf32>
    %21 = tpu.matmul %19, %18, %cst {dimension_numbers = #tpu.dot_dimension_numbers<[1], [0], [0], [1], [0, 0, 1, 1], [], []>} : vector<8x64xf32>, vector<64x256xf32>, vector<8x256xf32> -> vector<8x256xf32>
    %22 = arith.index_cast %c0_i32_7 : i32 to index
    %c0_8 = arith.constant 0 : index
    %c0_9 = arith.constant 0 : index
    %23 = vector.load %arg2[%22, %c0_8, %c0_9] : memref<8x8x256xf32, #tpu.memory_space<vmem>>, vector<1x8x256xf32>
    %24 = vector.shape_cast %23 : vector<1x8x256xf32> to vector<8x256xf32>
    %25 = arith.addf %21, %24 : vector<8x256xf32>
    %26 = math.tanh %25 : vector<8x256xf32>
    %27 = arith.negf %25 : vector<8x256xf32>
    %28 = math.exp %27 : vector<8x256xf32>
    %cst_10 = arith.constant 1.000000e+00 : f32
    %29 = vector.broadcast %cst_10 : f32 to vector<8x256xf32>
    %30 = arith.addf %29, %28 : vector<8x256xf32>
    %31 = arith.divf %29, %30 : vector<8x256xf32>
    %32 = arith.select %17, %26, %31 : vector<8x256xi1>, vector<8x256xf32>
    %33 = vector.extract_strided_slice %32 {offsets = [0, 0], sizes = [8, 64], strides = [1, 1]} : vector<8x256xf32> to vector<8x64xf32>
    %34 = vector.extract_strided_slice %32 {offsets = [0, 64], sizes = [8, 64], strides = [1, 1]} : vector<8x256xf32> to vector<8x64xf32>
    %35 = vector.extract_strided_slice %32 {offsets = [0, 128], sizes = [8, 64], strides = [1, 1]} : vector<8x256xf32> to vector<8x64xf32>
    %36 = vector.extract_strided_slice %32 {offsets = [0, 192], sizes = [8, 64], strides = [1, 1]} : vector<8x256xf32> to vector<8x64xf32>
    %37 = arith.mulf %34, %20 : vector<8x64xf32>
    %38 = arith.mulf %33, %35 : vector<8x64xf32>
    %39 = arith.addf %37, %38 : vector<8x64xf32>
    %40 = math.tanh %39 : vector<8x64xf32>
    %41 = arith.mulf %36, %40 : vector<8x64xf32>
    %42 = vector.broadcast %c0_i32_7 : i32 to vector<8x64xi32>
    %43 = arith.muli %42, %11 : vector<8x64xi32>
    %44 = arith.addi %8, %43 : vector<8x64xi32>
    %45 = arith.cmpi slt, %44, %2 : vector<8x64xi32>
    %46 = arith.select %45, %41, %19 : vector<8x64xi1>, vector<8x64xf32>
    %47 = arith.select %45, %39, %20 : vector<8x64xi1>, vector<8x64xf32>
    %cst_11 = arith.constant 0.000000e+00 : f32
    %48 = vector.broadcast %cst_11 : f32 to vector<8x64xf32>
    %49 = arith.select %45, %41, %48 : vector<8x64xi1>, vector<8x64xf32>
    %c8_i32 = arith.constant 8 : i32
    %50 = arith.muli %c0_i32_7, %c8_i32 : i32
    %51 = tpu.assume_multiple %50, 8 : i32
    %c7_i32_12 = arith.constant 7 : i32
    %52 = arith.subi %c7_i32_12, %c0_i32_7 : i32
    %c8_i32_13 = arith.constant 8 : i32
    %53 = arith.muli %52, %c8_i32_13 : i32
    %54 = tpu.assume_multiple %53, 8 : i32
    %55 = vector.extract_strided_slice %49 {offsets = [0, 0], sizes = [8, 32], strides = [1, 1]} : vector<8x64xf32> to vector<8x32xf32>
    %56 = arith.index_cast %51 : i32 to index
    %c0_14 = arith.constant 0 : index
    %57 = vector.load %arg9[%56, %c0_14] : memref<64x32xf32, #tpu.memory_space<vmem>>, vector<8x32xf32>
    tpu.vector_store %arg9[%56, %c0_14], %55 {strides = array<i32>} : memref<64x32xf32, #tpu.memory_space<vmem>>, vector<8x32xf32>,
    %58 = vector.extract_strided_slice %49 {offsets = [0, 32], sizes = [8, 32], strides = [1, 1]} : vector<8x64xf32> to vector<8x32xf32>
    %59 = arith.index_cast %54 : i32 to index
    %c0_15 = arith.constant 0 : index
    %60 = vector.load %arg10[%59, %c0_15] : memref<64x32xf32, #tpu.memory_space<vmem>>, vector<8x32xf32>
    tpu.vector_store %arg10[%59, %c0_15], %58 {strides = array<i32>} : memref<64x32xf32, #tpu.memory_space<vmem>>, vector<8x32xf32>,
    %c1_i32_16 = arith.constant 1 : i32
    %cst_17 = arith.constant dense<0.000000e+00> : vector<8x256xf32>
    %61 = tpu.matmul %46, %18, %cst_17 {dimension_numbers = #tpu.dot_dimension_numbers<[1], [0], [0], [1], [0, 0, 1, 1], [], []>} : vector<8x64xf32>, vector<64x256xf32>, vector<8x256xf32> -> vector<8x256xf32>
    %62 = arith.index_cast %c1_i32_16 : i32 to index
    %c0_18 = arith.constant 0 : index
    %c0_19 = arith.constant 0 : index
    %63 = vector.load %arg2[%62, %c0_18, %c0_19] : memref<8x8x256xf32, #tpu.memory_space<vmem>>, vector<1x8x256xf32>
    %64 = vector.shape_cast %63 : vector<1x8x256xf32> to vector<8x256xf32>
    %65 = arith.addf %61, %64 : vector<8x256xf32>
    %66 = math.tanh %65 : vector<8x256xf32>
    %67 = arith.negf %65 : vector<8x256xf32>
    %68 = math.exp %67 : vector<8x256xf32>
    %cst_20 = arith.constant 1.000000e+00 : f32
    %69 = vector.broadcast %cst_20 : f32 to vector<8x256xf32>
    %70 = arith.addf %69, %68 : vector<8x256xf32>
    %71 = arith.divf %69, %70 : vector<8x256xf32>
    %72 = arith.select %17, %66, %71 : vector<8x256xi1>, vector<8x256xf32>
    %73 = vector.extract_strided_slice %72 {offsets = [0, 0], sizes = [8, 64], strides = [1, 1]} : vector<8x256xf32> to vector<8x64xf32>
    %74 = vector.extract_strided_slice %72 {offsets = [0, 64], sizes = [8, 64], strides = [1, 1]} : vector<8x256xf32> to vector<8x64xf32>
    %75 = vector.extract_strided_slice %72 {offsets = [0, 128], sizes = [8, 64], strides = [1, 1]} : vector<8x256xf32> to vector<8x64xf32>
    %76 = vector.extract_strided_slice %72 {offsets = [0, 192], sizes = [8, 64], strides = [1, 1]} : vector<8x256xf32> to vector<8x64xf32>
    %77 = arith.mulf %74, %47 : vector<8x64xf32>
    %78 = arith.mulf %73, %75 : vector<8x64xf32>
    %79 = arith.addf %77, %78 : vector<8x64xf32>
    %80 = math.tanh %79 : vector<8x64xf32>
    %81 = arith.mulf %76, %80 : vector<8x64xf32>
    %82 = vector.broadcast %c1_i32_16 : i32 to vector<8x64xi32>
    %83 = arith.muli %82, %11 : vector<8x64xi32>
    %84 = arith.addi %8, %83 : vector<8x64xi32>
    %85 = arith.cmpi slt, %84, %2 : vector<8x64xi32>
    %86 = arith.select %85, %81, %46 : vector<8x64xi1>, vector<8x64xf32>
    %87 = arith.select %85, %79, %47 : vector<8x64xi1>, vector<8x64xf32>
    %cst_21 = arith.constant 0.000000e+00 : f32
    %88 = vector.broadcast %cst_21 : f32 to vector<8x64xf32>
    %89 = arith.select %85, %81, %88 : vector<8x64xi1>, vector<8x64xf32>
    %c8_i32_22 = arith.constant 8 : i32
    %90 = arith.muli %c1_i32_16, %c8_i32_22 : i32
    %91 = tpu.assume_multiple %90, 8 : i32
    %c7_i32_23 = arith.constant 7 : i32
    %92 = arith.subi %c7_i32_23, %c1_i32_16 : i32
    %c8_i32_24 = arith.constant 8 : i32
    %93 = arith.muli %92, %c8_i32_24 : i32
    %94 = tpu.assume_multiple %93, 8 : i32
    %95 = vector.extract_strided_slice %89 {offsets = [0, 0], sizes = [8, 32], strides = [1, 1]} : vector<8x64xf32> to vector<8x32xf32>
    %96 = arith.index_cast %91 : i32 to index
    %c0_25 = arith.constant 0 : index
    %97 = vector.load %arg9[%96, %c0_25] : memref<64x32xf32, #tpu.memory_space<vmem>>, vector<8x32xf32>
    tpu.vector_store %arg9[%96, %c0_25], %95 {strides = array<i32>} : memref<64x32xf32, #tpu.memory_space<vmem>>, vector<8x32xf32>,
    %98 = vector.extract_strided_slice %89 {offsets = [0, 32], sizes = [8, 32], strides = [1, 1]} : vector<8x64xf32> to vector<8x32xf32>
    %99 = arith.index_cast %94 : i32 to index
    %c0_26 = arith.constant 0 : index
    %100 = vector.load %arg10[%99, %c0_26] : memref<64x32xf32, #tpu.memory_space<vmem>>, vector<8x32xf32>
    tpu.vector_store %arg10[%99, %c0_26], %98 {strides = array<i32>} : memref<64x32xf32, #tpu.memory_space<vmem>>, vector<8x32xf32>,
    %c2_i32 = arith.constant 2 : i32
    %cst_27 = arith.constant dense<0.000000e+00> : vector<8x256xf32>
    %101 = tpu.matmul %86, %18, %cst_27 {dimension_numbers = #tpu.dot_dimension_numbers<[1], [0], [0], [1], [0, 0, 1, 1], [], []>} : vector<8x64xf32>, vector<64x256xf32>, vector<8x256xf32> -> vector<8x256xf32>
    %102 = arith.index_cast %c2_i32 : i32 to index
    %c0_28 = arith.constant 0 : index
    %c0_29 = arith.constant 0 : index
    %103 = vector.load %arg2[%102, %c0_28, %c0_29] : memref<8x8x256xf32, #tpu.memory_space<vmem>>, vector<1x8x256xf32>
    %104 = vector.shape_cast %103 : vector<1x8x256xf32> to vector<8x256xf32>
    %105 = arith.addf %101, %104 : vector<8x256xf32>
    %106 = math.tanh %105 : vector<8x256xf32>
    %107 = arith.negf %105 : vector<8x256xf32>
    %108 = math.exp %107 : vector<8x256xf32>
    %cst_30 = arith.constant 1.000000e+00 : f32
    %109 = vector.broadcast %cst_30 : f32 to vector<8x256xf32>
    %110 = arith.addf %109, %108 : vector<8x256xf32>
    %111 = arith.divf %109, %110 : vector<8x256xf32>
    %112 = arith.select %17, %106, %111 : vector<8x256xi1>, vector<8x256xf32>
    %113 = vector.extract_strided_slice %112 {offsets = [0, 0], sizes = [8, 64], strides = [1, 1]} : vector<8x256xf32> to vector<8x64xf32>
    %114 = vector.extract_strided_slice %112 {offsets = [0, 64], sizes = [8, 64], strides = [1, 1]} : vector<8x256xf32> to vector<8x64xf32>
    %115 = vector.extract_strided_slice %112 {offsets = [0, 128], sizes = [8, 64], strides = [1, 1]} : vector<8x256xf32> to vector<8x64xf32>
    %116 = vector.extract_strided_slice %112 {offsets = [0, 192], sizes = [8, 64], strides = [1, 1]} : vector<8x256xf32> to vector<8x64xf32>
    %117 = arith.mulf %114, %87 : vector<8x64xf32>
    %118 = arith.mulf %113, %115 : vector<8x64xf32>
    %119 = arith.addf %117, %118 : vector<8x64xf32>
    %120 = math.tanh %119 : vector<8x64xf32>
    %121 = arith.mulf %116, %120 : vector<8x64xf32>
    %122 = vector.broadcast %c2_i32 : i32 to vector<8x64xi32>
    %123 = arith.muli %122, %11 : vector<8x64xi32>
    %124 = arith.addi %8, %123 : vector<8x64xi32>
    %125 = arith.cmpi slt, %124, %2 : vector<8x64xi32>
    %126 = arith.select %125, %121, %86 : vector<8x64xi1>, vector<8x64xf32>
    %127 = arith.select %125, %119, %87 : vector<8x64xi1>, vector<8x64xf32>
    %cst_31 = arith.constant 0.000000e+00 : f32
    %128 = vector.broadcast %cst_31 : f32 to vector<8x64xf32>
    %129 = arith.select %125, %121, %128 : vector<8x64xi1>, vector<8x64xf32>
    %c8_i32_32 = arith.constant 8 : i32
    %130 = arith.muli %c2_i32, %c8_i32_32 : i32
    %131 = tpu.assume_multiple %130, 8 : i32
    %c7_i32_33 = arith.constant 7 : i32
    %132 = arith.subi %c7_i32_33, %c2_i32 : i32
    %c8_i32_34 = arith.constant 8 : i32
    %133 = arith.muli %132, %c8_i32_34 : i32
    %134 = tpu.assume_multiple %133, 8 : i32
    %135 = vector.extract_strided_slice %129 {offsets = [0, 0], sizes = [8, 32], strides = [1, 1]} : vector<8x64xf32> to vector<8x32xf32>
    %136 = arith.index_cast %131 : i32 to index
    %c0_35 = arith.constant 0 : index
    %137 = vector.load %arg9[%136, %c0_35] : memref<64x32xf32, #tpu.memory_space<vmem>>, vector<8x32xf32>
    tpu.vector_store %arg9[%136, %c0_35], %135 {strides = array<i32>} : memref<64x32xf32, #tpu.memory_space<vmem>>, vector<8x32xf32>,
    %138 = vector.extract_strided_slice %129 {offsets = [0, 32], sizes = [8, 32], strides = [1, 1]} : vector<8x64xf32> to vector<8x32xf32>
    %139 = arith.index_cast %134 : i32 to index
    %c0_36 = arith.constant 0 : index
    %140 = vector.load %arg10[%139, %c0_36] : memref<64x32xf32, #tpu.memory_space<vmem>>, vector<8x32xf32>
    tpu.vector_store %arg10[%139, %c0_36], %138 {strides = array<i32>} : memref<64x32xf32, #tpu.memory_space<vmem>>, vector<8x32xf32>,
    %c3_i32 = arith.constant 3 : i32
    %cst_37 = arith.constant dense<0.000000e+00> : vector<8x256xf32>
    %141 = tpu.matmul %126, %18, %cst_37 {dimension_numbers = #tpu.dot_dimension_numbers<[1], [0], [0], [1], [0, 0, 1, 1], [], []>} : vector<8x64xf32>, vector<64x256xf32>, vector<8x256xf32> -> vector<8x256xf32>
    %142 = arith.index_cast %c3_i32 : i32 to index
    %c0_38 = arith.constant 0 : index
    %c0_39 = arith.constant 0 : index
    %143 = vector.load %arg2[%142, %c0_38, %c0_39] : memref<8x8x256xf32, #tpu.memory_space<vmem>>, vector<1x8x256xf32>
    %144 = vector.shape_cast %143 : vector<1x8x256xf32> to vector<8x256xf32>
    %145 = arith.addf %141, %144 : vector<8x256xf32>
    %146 = math.tanh %145 : vector<8x256xf32>
    %147 = arith.negf %145 : vector<8x256xf32>
    %148 = math.exp %147 : vector<8x256xf32>
    %cst_40 = arith.constant 1.000000e+00 : f32
    %149 = vector.broadcast %cst_40 : f32 to vector<8x256xf32>
    %150 = arith.addf %149, %148 : vector<8x256xf32>
    %151 = arith.divf %149, %150 : vector<8x256xf32>
    %152 = arith.select %17, %146, %151 : vector<8x256xi1>, vector<8x256xf32>
    %153 = vector.extract_strided_slice %152 {offsets = [0, 0], sizes = [8, 64], strides = [1, 1]} : vector<8x256xf32> to vector<8x64xf32>
    %154 = vector.extract_strided_slice %152 {offsets = [0, 64], sizes = [8, 64], strides = [1, 1]} : vector<8x256xf32> to vector<8x64xf32>
    %155 = vector.extract_strided_slice %152 {offsets = [0, 128], sizes = [8, 64], strides = [1, 1]} : vector<8x256xf32> to vector<8x64xf32>
    %156 = vector.extract_strided_slice %152 {offsets = [0, 192], sizes = [8, 64], strides = [1, 1]} : vector<8x256xf32> to vector<8x64xf32>
    %157 = arith.mulf %154, %127 : vector<8x64xf32>
    %158 = arith.mulf %153, %155 : vector<8x64xf32>
    %159 = arith.addf %157, %158 : vector<8x64xf32>
    %160 = math.tanh %159 : vector<8x64xf32>
    %161 = arith.mulf %156, %160 : vector<8x64xf32>
    %162 = vector.broadcast %c3_i32 : i32 to vector<8x64xi32>
    %163 = arith.muli %162, %11 : vector<8x64xi32>
    %164 = arith.addi %8, %163 : vector<8x64xi32>
    %165 = arith.cmpi slt, %164, %2 : vector<8x64xi32>
    %166 = arith.select %165, %161, %126 : vector<8x64xi1>, vector<8x64xf32>
    %167 = arith.select %165, %159, %127 : vector<8x64xi1>, vector<8x64xf32>
    %cst_41 = arith.constant 0.000000e+00 : f32
    %168 = vector.broadcast %cst_41 : f32 to vector<8x64xf32>
    %169 = arith.select %165, %161, %168 : vector<8x64xi1>, vector<8x64xf32>
    %c8_i32_42 = arith.constant 8 : i32
    %170 = arith.muli %c3_i32, %c8_i32_42 : i32
    %171 = tpu.assume_multiple %170, 8 : i32
    %c7_i32_43 = arith.constant 7 : i32
    %172 = arith.subi %c7_i32_43, %c3_i32 : i32
    %c8_i32_44 = arith.constant 8 : i32
    %173 = arith.muli %172, %c8_i32_44 : i32
    %174 = tpu.assume_multiple %173, 8 : i32
    %175 = vector.extract_strided_slice %169 {offsets = [0, 0], sizes = [8, 32], strides = [1, 1]} : vector<8x64xf32> to vector<8x32xf32>
    %176 = arith.index_cast %171 : i32 to index
    %c0_45 = arith.constant 0 : index
    %177 = vector.load %arg9[%176, %c0_45] : memref<64x32xf32, #tpu.memory_space<vmem>>, vector<8x32xf32>
    tpu.vector_store %arg9[%176, %c0_45], %175 {strides = array<i32>} : memref<64x32xf32, #tpu.memory_space<vmem>>, vector<8x32xf32>,
    %178 = vector.extract_strided_slice %169 {offsets = [0, 32], sizes = [8, 32], strides = [1, 1]} : vector<8x64xf32> to vector<8x32xf32>
    %179 = arith.index_cast %174 : i32 to index
    %c0_46 = arith.constant 0 : index
    %180 = vector.load %arg10[%179, %c0_46] : memref<64x32xf32, #tpu.memory_space<vmem>>, vector<8x32xf32>
    tpu.vector_store %arg10[%179, %c0_46], %178 {strides = array<i32>} : memref<64x32xf32, #tpu.memory_space<vmem>>, vector<8x32xf32>,
    %c4_i32 = arith.constant 4 : i32
    %cst_47 = arith.constant dense<0.000000e+00> : vector<8x256xf32>
    %181 = tpu.matmul %166, %18, %cst_47 {dimension_numbers = #tpu.dot_dimension_numbers<[1], [0], [0], [1], [0, 0, 1, 1], [], []>} : vector<8x64xf32>, vector<64x256xf32>, vector<8x256xf32> -> vector<8x256xf32>
    %182 = arith.index_cast %c4_i32 : i32 to index
    %c0_48 = arith.constant 0 : index
    %c0_49 = arith.constant 0 : index
    %183 = vector.load %arg2[%182, %c0_48, %c0_49] : memref<8x8x256xf32, #tpu.memory_space<vmem>>, vector<1x8x256xf32>
    %184 = vector.shape_cast %183 : vector<1x8x256xf32> to vector<8x256xf32>
    %185 = arith.addf %181, %184 : vector<8x256xf32>
    %186 = math.tanh %185 : vector<8x256xf32>
    %187 = arith.negf %185 : vector<8x256xf32>
    %188 = math.exp %187 : vector<8x256xf32>
    %cst_50 = arith.constant 1.000000e+00 : f32
    %189 = vector.broadcast %cst_50 : f32 to vector<8x256xf32>
    %190 = arith.addf %189, %188 : vector<8x256xf32>
    %191 = arith.divf %189, %190 : vector<8x256xf32>
    %192 = arith.select %17, %186, %191 : vector<8x256xi1>, vector<8x256xf32>
    %193 = vector.extract_strided_slice %192 {offsets = [0, 0], sizes = [8, 64], strides = [1, 1]} : vector<8x256xf32> to vector<8x64xf32>
    %194 = vector.extract_strided_slice %192 {offsets = [0, 64], sizes = [8, 64], strides = [1, 1]} : vector<8x256xf32> to vector<8x64xf32>
    %195 = vector.extract_strided_slice %192 {offsets = [0, 128], sizes = [8, 64], strides = [1, 1]} : vector<8x256xf32> to vector<8x64xf32>
    %196 = vector.extract_strided_slice %192 {offsets = [0, 192], sizes = [8, 64], strides = [1, 1]} : vector<8x256xf32> to vector<8x64xf32>
    %197 = arith.mulf %194, %167 : vector<8x64xf32>
    %198 = arith.mulf %193, %195 : vector<8x64xf32>
    %199 = arith.addf %197, %198 : vector<8x64xf32>
    %200 = math.tanh %199 : vector<8x64xf32>
    %201 = arith.mulf %196, %200 : vector<8x64xf32>
    %202 = vector.broadcast %c4_i32 : i32 to vector<8x64xi32>
    %203 = arith.muli %202, %11 : vector<8x64xi32>
    %204 = arith.addi %8, %203 : vector<8x64xi32>
    %205 = arith.cmpi slt, %204, %2 : vector<8x64xi32>
    %206 = arith.select %205, %201, %166 : vector<8x64xi1>, vector<8x64xf32>
    %207 = arith.select %205, %199, %167 : vector<8x64xi1>, vector<8x64xf32>
    %cst_51 = arith.constant 0.000000e+00 : f32
    %208 = vector.broadcast %cst_51 : f32 to vector<8x64xf32>
    %209 = arith.select %205, %201, %208 : vector<8x64xi1>, vector<8x64xf32>
    %c8_i32_52 = arith.constant 8 : i32
    %210 = arith.muli %c4_i32, %c8_i32_52 : i32
    %211 = tpu.assume_multiple %210, 8 : i32
    %c7_i32_53 = arith.constant 7 : i32
    %212 = arith.subi %c7_i32_53, %c4_i32 : i32
    %c8_i32_54 = arith.constant 8 : i32
    %213 = arith.muli %212, %c8_i32_54 : i32
    %214 = tpu.assume_multiple %213, 8 : i32
    %215 = vector.extract_strided_slice %209 {offsets = [0, 0], sizes = [8, 32], strides = [1, 1]} : vector<8x64xf32> to vector<8x32xf32>
    %216 = arith.index_cast %211 : i32 to index
    %c0_55 = arith.constant 0 : index
    %217 = vector.load %arg9[%216, %c0_55] : memref<64x32xf32, #tpu.memory_space<vmem>>, vector<8x32xf32>
    tpu.vector_store %arg9[%216, %c0_55], %215 {strides = array<i32>} : memref<64x32xf32, #tpu.memory_space<vmem>>, vector<8x32xf32>,
    %218 = vector.extract_strided_slice %209 {offsets = [0, 32], sizes = [8, 32], strides = [1, 1]} : vector<8x64xf32> to vector<8x32xf32>
    %219 = arith.index_cast %214 : i32 to index
    %c0_56 = arith.constant 0 : index
    %220 = vector.load %arg10[%219, %c0_56] : memref<64x32xf32, #tpu.memory_space<vmem>>, vector<8x32xf32>
    tpu.vector_store %arg10[%219, %c0_56], %218 {strides = array<i32>} : memref<64x32xf32, #tpu.memory_space<vmem>>, vector<8x32xf32>,
    %c5_i32 = arith.constant 5 : i32
    %cst_57 = arith.constant dense<0.000000e+00> : vector<8x256xf32>
    %221 = tpu.matmul %206, %18, %cst_57 {dimension_numbers = #tpu.dot_dimension_numbers<[1], [0], [0], [1], [0, 0, 1, 1], [], []>} : vector<8x64xf32>, vector<64x256xf32>, vector<8x256xf32> -> vector<8x256xf32>
    %222 = arith.index_cast %c5_i32 : i32 to index
    %c0_58 = arith.constant 0 : index
    %c0_59 = arith.constant 0 : index
    %223 = vector.load %arg2[%222, %c0_58, %c0_59] : memref<8x8x256xf32, #tpu.memory_space<vmem>>, vector<1x8x256xf32>
    %224 = vector.shape_cast %223 : vector<1x8x256xf32> to vector<8x256xf32>
    %225 = arith.addf %221, %224 : vector<8x256xf32>
    %226 = math.tanh %225 : vector<8x256xf32>
    %227 = arith.negf %225 : vector<8x256xf32>
    %228 = math.exp %227 : vector<8x256xf32>
    %cst_60 = arith.constant 1.000000e+00 : f32
    %229 = vector.broadcast %cst_60 : f32 to vector<8x256xf32>
    %230 = arith.addf %229, %228 : vector<8x256xf32>
    %231 = arith.divf %229, %230 : vector<8x256xf32>
    %232 = arith.select %17, %226, %231 : vector<8x256xi1>, vector<8x256xf32>
    %233 = vector.extract_strided_slice %232 {offsets = [0, 0], sizes = [8, 64], strides = [1, 1]} : vector<8x256xf32> to vector<8x64xf32>
    %234 = vector.extract_strided_slice %232 {offsets = [0, 64], sizes = [8, 64], strides = [1, 1]} : vector<8x256xf32> to vector<8x64xf32>
    %235 = vector.extract_strided_slice %232 {offsets = [0, 128], sizes = [8, 64], strides = [1, 1]} : vector<8x256xf32> to vector<8x64xf32>
    %236 = vector.extract_strided_slice %232 {offsets = [0, 192], sizes = [8, 64], strides = [1, 1]} : vector<8x256xf32> to vector<8x64xf32>
    %237 = arith.mulf %234, %207 : vector<8x64xf32>
    %238 = arith.mulf %233, %235 : vector<8x64xf32>
    %239 = arith.addf %237, %238 : vector<8x64xf32>
    %240 = math.tanh %239 : vector<8x64xf32>
    %241 = arith.mulf %236, %240 : vector<8x64xf32>
    %242 = vector.broadcast %c5_i32 : i32 to vector<8x64xi32>
    %243 = arith.muli %242, %11 : vector<8x64xi32>
    %244 = arith.addi %8, %243 : vector<8x64xi32>
    %245 = arith.cmpi slt, %244, %2 : vector<8x64xi32>
    %246 = arith.select %245, %241, %206 : vector<8x64xi1>, vector<8x64xf32>
    %247 = arith.select %245, %239, %207 : vector<8x64xi1>, vector<8x64xf32>
    %cst_61 = arith.constant 0.000000e+00 : f32
    %248 = vector.broadcast %cst_61 : f32 to vector<8x64xf32>
    %249 = arith.select %245, %241, %248 : vector<8x64xi1>, vector<8x64xf32>
    %c8_i32_62 = arith.constant 8 : i32
    %250 = arith.muli %c5_i32, %c8_i32_62 : i32
    %251 = tpu.assume_multiple %250, 8 : i32
    %c7_i32_63 = arith.constant 7 : i32
    %252 = arith.subi %c7_i32_63, %c5_i32 : i32
    %c8_i32_64 = arith.constant 8 : i32
    %253 = arith.muli %252, %c8_i32_64 : i32
    %254 = tpu.assume_multiple %253, 8 : i32
    %255 = vector.extract_strided_slice %249 {offsets = [0, 0], sizes = [8, 32], strides = [1, 1]} : vector<8x64xf32> to vector<8x32xf32>
    %256 = arith.index_cast %251 : i32 to index
    %c0_65 = arith.constant 0 : index
    %257 = vector.load %arg9[%256, %c0_65] : memref<64x32xf32, #tpu.memory_space<vmem>>, vector<8x32xf32>
    tpu.vector_store %arg9[%256, %c0_65], %255 {strides = array<i32>} : memref<64x32xf32, #tpu.memory_space<vmem>>, vector<8x32xf32>,
    %258 = vector.extract_strided_slice %249 {offsets = [0, 32], sizes = [8, 32], strides = [1, 1]} : vector<8x64xf32> to vector<8x32xf32>
    %259 = arith.index_cast %254 : i32 to index
    %c0_66 = arith.constant 0 : index
    %260 = vector.load %arg10[%259, %c0_66] : memref<64x32xf32, #tpu.memory_space<vmem>>, vector<8x32xf32>
    tpu.vector_store %arg10[%259, %c0_66], %258 {strides = array<i32>} : memref<64x32xf32, #tpu.memory_space<vmem>>, vector<8x32xf32>,
    %c6_i32 = arith.constant 6 : i32
    %cst_67 = arith.constant dense<0.000000e+00> : vector<8x256xf32>
    %261 = tpu.matmul %246, %18, %cst_67 {dimension_numbers = #tpu.dot_dimension_numbers<[1], [0], [0], [1], [0, 0, 1, 1], [], []>} : vector<8x64xf32>, vector<64x256xf32>, vector<8x256xf32> -> vector<8x256xf32>
    %262 = arith.index_cast %c6_i32 : i32 to index
    %c0_68 = arith.constant 0 : index
    %c0_69 = arith.constant 0 : index
    %263 = vector.load %arg2[%262, %c0_68, %c0_69] : memref<8x8x256xf32, #tpu.memory_space<vmem>>, vector<1x8x256xf32>
    %264 = vector.shape_cast %263 : vector<1x8x256xf32> to vector<8x256xf32>
    %265 = arith.addf %261, %264 : vector<8x256xf32>
    %266 = math.tanh %265 : vector<8x256xf32>
    %267 = arith.negf %265 : vector<8x256xf32>
    %268 = math.exp %267 : vector<8x256xf32>
    %cst_70 = arith.constant 1.000000e+00 : f32
    %269 = vector.broadcast %cst_70 : f32 to vector<8x256xf32>
    %270 = arith.addf %269, %268 : vector<8x256xf32>
    %271 = arith.divf %269, %270 : vector<8x256xf32>
    %272 = arith.select %17, %266, %271 : vector<8x256xi1>, vector<8x256xf32>
    %273 = vector.extract_strided_slice %272 {offsets = [0, 0], sizes = [8, 64], strides = [1, 1]} : vector<8x256xf32> to vector<8x64xf32>
    %274 = vector.extract_strided_slice %272 {offsets = [0, 64], sizes = [8, 64], strides = [1, 1]} : vector<8x256xf32> to vector<8x64xf32>
    %275 = vector.extract_strided_slice %272 {offsets = [0, 128], sizes = [8, 64], strides = [1, 1]} : vector<8x256xf32> to vector<8x64xf32>
    %276 = vector.extract_strided_slice %272 {offsets = [0, 192], sizes = [8, 64], strides = [1, 1]} : vector<8x256xf32> to vector<8x64xf32>
    %277 = arith.mulf %274, %247 : vector<8x64xf32>
    %278 = arith.mulf %273, %275 : vector<8x64xf32>
    %279 = arith.addf %277, %278 : vector<8x64xf32>
    %280 = math.tanh %279 : vector<8x64xf32>
    %281 = arith.mulf %276, %280 : vector<8x64xf32>
    %282 = vector.broadcast %c6_i32 : i32 to vector<8x64xi32>
    %283 = arith.muli %282, %11 : vector<8x64xi32>
    %284 = arith.addi %8, %283 : vector<8x64xi32>
    %285 = arith.cmpi slt, %284, %2 : vector<8x64xi32>
    %286 = arith.select %285, %281, %246 : vector<8x64xi1>, vector<8x64xf32>
    %287 = arith.select %285, %279, %247 : vector<8x64xi1>, vector<8x64xf32>
    %cst_71 = arith.constant 0.000000e+00 : f32
    %288 = vector.broadcast %cst_71 : f32 to vector<8x64xf32>
    %289 = arith.select %285, %281, %288 : vector<8x64xi1>, vector<8x64xf32>
    %c8_i32_72 = arith.constant 8 : i32
    %290 = arith.muli %c6_i32, %c8_i32_72 : i32
    %291 = tpu.assume_multiple %290, 8 : i32
    %c7_i32_73 = arith.constant 7 : i32
    %292 = arith.subi %c7_i32_73, %c6_i32 : i32
    %c8_i32_74 = arith.constant 8 : i32
    %293 = arith.muli %292, %c8_i32_74 : i32
    %294 = tpu.assume_multiple %293, 8 : i32
    %295 = vector.extract_strided_slice %289 {offsets = [0, 0], sizes = [8, 32], strides = [1, 1]} : vector<8x64xf32> to vector<8x32xf32>
    %296 = arith.index_cast %291 : i32 to index
    %c0_75 = arith.constant 0 : index
    %297 = vector.load %arg9[%296, %c0_75] : memref<64x32xf32, #tpu.memory_space<vmem>>, vector<8x32xf32>
    tpu.vector_store %arg9[%296, %c0_75], %295 {strides = array<i32>} : memref<64x32xf32, #tpu.memory_space<vmem>>, vector<8x32xf32>,
    %298 = vector.extract_strided_slice %289 {offsets = [0, 32], sizes = [8, 32], strides = [1, 1]} : vector<8x64xf32> to vector<8x32xf32>
    %299 = arith.index_cast %294 : i32 to index
    %c0_76 = arith.constant 0 : index
    %300 = vector.load %arg10[%299, %c0_76] : memref<64x32xf32, #tpu.memory_space<vmem>>, vector<8x32xf32>
    tpu.vector_store %arg10[%299, %c0_76], %298 {strides = array<i32>} : memref<64x32xf32, #tpu.memory_space<vmem>>, vector<8x32xf32>,
    %c7_i32_77 = arith.constant 7 : i32
    %cst_78 = arith.constant dense<0.000000e+00> : vector<8x256xf32>
    %301 = tpu.matmul %286, %18, %cst_78 {dimension_numbers = #tpu.dot_dimension_numbers<[1], [0], [0], [1], [0, 0, 1, 1], [], []>} : vector<8x64xf32>, vector<64x256xf32>, vector<8x256xf32> -> vector<8x256xf32>
    %302 = arith.index_cast %c7_i32_77 : i32 to index
    %c0_79 = arith.constant 0 : index
    %c0_80 = arith.constant 0 : index
    %303 = vector.load %arg2[%302, %c0_79, %c0_80] : memref<8x8x256xf32, #tpu.memory_space<vmem>>, vector<1x8x256xf32>
    %304 = vector.shape_cast %303 : vector<1x8x256xf32> to vector<8x256xf32>
    %305 = arith.addf %301, %304 : vector<8x256xf32>
    %306 = math.tanh %305 : vector<8x256xf32>
    %307 = arith.negf %305 : vector<8x256xf32>
    %308 = math.exp %307 : vector<8x256xf32>
    %cst_81 = arith.constant 1.000000e+00 : f32
    %309 = vector.broadcast %cst_81 : f32 to vector<8x256xf32>
    %310 = arith.addf %309, %308 : vector<8x256xf32>
    %311 = arith.divf %309, %310 : vector<8x256xf32>
    %312 = arith.select %17, %306, %311 : vector<8x256xi1>, vector<8x256xf32>
    %313 = vector.extract_strided_slice %312 {offsets = [0, 0], sizes = [8, 64], strides = [1, 1]} : vector<8x256xf32> to vector<8x64xf32>
    %314 = vector.extract_strided_slice %312 {offsets = [0, 64], sizes = [8, 64], strides = [1, 1]} : vector<8x256xf32> to vector<8x64xf32>
    %315 = vector.extract_strided_slice %312 {offsets = [0, 128], sizes = [8, 64], strides = [1, 1]} : vector<8x256xf32> to vector<8x64xf32>
    %316 = vector.extract_strided_slice %312 {offsets = [0, 192], sizes = [8, 64], strides = [1, 1]} : vector<8x256xf32> to vector<8x64xf32>
    %317 = arith.mulf %314, %287 : vector<8x64xf32>
    %318 = arith.mulf %313, %315 : vector<8x64xf32>
    %319 = arith.addf %317, %318 : vector<8x64xf32>
    %320 = math.tanh %319 : vector<8x64xf32>
    %321 = arith.mulf %316, %320 : vector<8x64xf32>
    %322 = vector.broadcast %c7_i32_77 : i32 to vector<8x64xi32>
    %323 = arith.muli %322, %11 : vector<8x64xi32>
    %324 = arith.addi %8, %323 : vector<8x64xi32>
    %325 = arith.cmpi slt, %324, %2 : vector<8x64xi32>
    %326 = arith.select %325, %321, %286 : vector<8x64xi1>, vector<8x64xf32>
    %327 = arith.select %325, %319, %287 : vector<8x64xi1>, vector<8x64xf32>
    %cst_82 = arith.constant 0.000000e+00 : f32
    %328 = vector.broadcast %cst_82 : f32 to vector<8x64xf32>
    %329 = arith.select %325, %321, %328 : vector<8x64xi1>, vector<8x64xf32>
    %c8_i32_83 = arith.constant 8 : i32
    %330 = arith.muli %c7_i32_77, %c8_i32_83 : i32
    %331 = tpu.assume_multiple %330, 8 : i32
    %c7_i32_84 = arith.constant 7 : i32
    %332 = arith.subi %c7_i32_84, %c7_i32_77 : i32
    %c8_i32_85 = arith.constant 8 : i32
    %333 = arith.muli %332, %c8_i32_85 : i32
    %334 = tpu.assume_multiple %333, 8 : i32
    %335 = vector.extract_strided_slice %329 {offsets = [0, 0], sizes = [8, 32], strides = [1, 1]} : vector<8x64xf32> to vector<8x32xf32>
    %336 = arith.index_cast %331 : i32 to index
    %c0_86 = arith.constant 0 : index
    %337 = vector.load %arg9[%336, %c0_86] : memref<64x32xf32, #tpu.memory_space<vmem>>, vector<8x32xf32>
    tpu.vector_store %arg9[%336, %c0_86], %335 {strides = array<i32>} : memref<64x32xf32, #tpu.memory_space<vmem>>, vector<8x32xf32>,
    %338 = vector.extract_strided_slice %329 {offsets = [0, 32], sizes = [8, 32], strides = [1, 1]} : vector<8x64xf32> to vector<8x32xf32>
    %339 = arith.index_cast %334 : i32 to index
    %c0_87 = arith.constant 0 : index
    %340 = vector.load %arg10[%339, %c0_87] : memref<64x32xf32, #tpu.memory_space<vmem>>, vector<8x32xf32>
    tpu.vector_store %arg10[%339, %c0_87], %338 {strides = array<i32>} : memref<64x32xf32, #tpu.memory_space<vmem>>, vector<8x32xf32>,
    %c8_i32_88 = arith.constant 8 : i32
    %c0_89 = arith.constant 0 : index
    %c0_90 = arith.constant 0 : index
    %341 = vector.load %arg6[%c0_89, %c0_90] : memref<64x128xf32, #tpu.memory_space<vmem>>, vector<64x128xf32>
    %c0_91 = arith.constant 0 : index
    %c0_92 = arith.constant 0 : index
    %342 = vector.load %arg9[%c0_91, %c0_92] : memref<64x32xf32, #tpu.memory_space<vmem>>, vector<64x32xf32>
    %343 = vector.extract_strided_slice %341 {offsets = [0, 0], sizes = [32, 128], strides = [1, 1]} : vector<64x128xf32> to vector<32x128xf32>
    %cst_93 = arith.constant dense<0.000000e+00> : vector<64x128xf32>
    %344 = tpu.matmul %342, %343, %cst_93 {dimension_numbers = #tpu.dot_dimension_numbers<[1], [0], [0], [1], [0, 0, 1, 1], [], []>} : vector<64x32xf32>, vector<32x128xf32>, vector<64x128xf32> -> vector<64x128xf32>
    %c0_94 = arith.constant 0 : index
    %c0_95 = arith.constant 0 : index
    %345 = vector.load %arg10[%c0_94, %c0_95] : memref<64x32xf32, #tpu.memory_space<vmem>>, vector<64x32xf32>
    %346 = vector.extract_strided_slice %341 {offsets = [32, 0], sizes = [32, 128], strides = [1, 1]} : vector<64x128xf32> to vector<32x128xf32>
    %cst_96 = arith.constant dense<0.000000e+00> : vector<64x128xf32>
    %347 = tpu.matmul %345, %346, %cst_96 {dimension_numbers = #tpu.dot_dimension_numbers<[1], [0], [0], [1], [0, 0, 1, 1], [], []>} : vector<64x32xf32>, vector<32x128xf32>, vector<64x128xf32> -> vector<64x128xf32>
    %348 = arith.addf %344, %347 : vector<64x128xf32>
    %c0_97 = arith.constant 0 : index
    %c0_98 = arith.constant 0 : index
    %349 = vector.load %arg7[%c0_97, %c0_98] : memref<1x128xf32, #tpu.memory_space<vmem>>, vector<1x128xf32>
    %350 = vector.broadcast %349 : vector<1x128xf32> to vector<64x128xf32>
    %351 = arith.addf %348, %350 : vector<64x128xf32>
    %c0_99 = arith.constant 0 : index
    %c0_100 = arith.constant 0 : index
    %352 = vector.load %arg8[%c0_99, %c0_100] : memref<64x128xf32, #tpu.memory_space<vmem>>, vector<64x128xf32>
    tpu.vector_store %arg8[%c0_99, %c0_100], %351 {strides = array<i32>} : memref<64x128xf32, #tpu.memory_space<vmem>>, vector<64x128xf32>,
    return
  }
  func.func @transform_0(%arg0: i32) -> (i32, i32) {
    %c0_i32 = arith.constant 0 : i32
    %c0_i32_0 = arith.constant 0 : i32
    %c0_i32_1 = arith.constant 0 : i32
    return %c0_i32, %c0_i32_0 : i32, i32
  }
  func.func @transform_1(%arg0: i32) -> (i32, i32, i32) {
    %c0_i32 = arith.constant 0 : i32
    %c0_i32_0 = arith.constant 0 : i32
    %c0_i32_1 = arith.constant 0 : i32
    %c0_i32_2 = arith.constant 0 : i32
    return %c0_i32, %c0_i32_0, %c0_i32_1 : i32, i32, i32
  }
  func.func @transform_2(%arg0: i32) -> (i32, i32) {
    %c0_i32 = arith.constant 0 : i32
    %c0_i32_0 = arith.constant 0 : i32
    %c0_i32_1 = arith.constant 0 : i32
    return %c0_i32, %c0_i32_0 : i32, i32
  }
  func.func @transform_3(%arg0: i32) -> (i32, i32) {
    %c0_i32 = arith.constant 0 : i32
    %c0_i32_0 = arith.constant 0 : i32
    %c0_i32_1 = arith.constant 0 : i32
    return %c0_i32, %c0_i32_0 : i32, i32
  }
  func.func @transform_4(%arg0: i32) -> (i32, i32) {
    %c0_i32 = arith.constant 0 : i32
    %c0_i32_0 = arith.constant 0 : i32
    %c0_i32_1 = arith.constant 0 : i32
    return %c0_i32, %c0_i32_0 : i32, i32
  }
  func.func @transform_5(%arg0: i32) -> (i32, i32) {
    %c0_i32 = arith.constant 0 : i32
    %c0_i32_0 = arith.constant 0 : i32
    %c0_i32_1 = arith.constant 0 : i32
    return %c0_i32, %c0_i32_0 : i32, i32
  }
  func.func @transform_6(%arg0: i32) -> (i32, i32) {
    %c0_i32 = arith.constant 0 : i32
    %c0_i32_0 = arith.constant 0 : i32
    %c0_i32_1 = arith.constant 0 : i32
    return %c0_i32, %c0_i32_0 : i32, i32
  }
  func.func @transform_7(%arg0: i32) -> (i32, i32) {
    %c0_i32 = arith.constant 0 : i32
    %c0_i32_0 = arith.constant 0 : i32
    %c0_i32_1 = arith.constant 0 : i32
    return %c0_i32, %c0_i32_0 : i32, i32
  }
}

</mosaic_0001>

<llo_original>
// kernel: lstm_forward.1
$region0: #{lstm_forward.1}
  #allocation0 [shape = 'u32[]', space=smem, size = 0x4, offset = 0x4, fixed_abs, tag = 'smem constant byte address 0x4 - core index']
  #allocation1 [shape = 'u32[72,128]{1,0:T(1,128)}', space=vmem, size = 0x9000, scoped, tag = 'internal scratch']
  #allocation2 [shape = 'f32[64,32]{1,0:T(8,128)}', space=vmem, size = 0x8000, scoped, tag = 'scratch operand']
  #allocation3 [shape = 'f32[64,32]{1,0:T(8,128)}', space=vmem, size = 0x8000, scoped, tag = 'scratch operand']
  %s0 = inlined_call_operand.vmem [shape: s32[8,1], index: 0, kind: input, shape index: {}]
  %s1 = inlined_call_operand.vmem [shape: f32[8,8,256], index: 1, kind: input, shape index: {}]
  %s2 = inlined_call_operand.vmem [shape: f32[64,256], index: 2, kind: input, shape index: {}]
  %s3 = inlined_call_operand.vmem [shape: f32[8,64], index: 3, kind: input, shape index: {}]
  %s4 = inlined_call_operand.vmem [shape: f32[8,64], index: 4, kind: input, shape index: {}]
  %s5 = inlined_call_operand.vmem [shape: f32[64,128], index: 5, kind: input, shape index: {}]
  %s6 = inlined_call_operand.vmem [shape: f32[1,128], index: 6, kind: input, shape index: {}]
  %s7 = inlined_call_operand.vmem [shape: f32[64,128], index: 7, kind: output, shape index: {}]
  %s8 = sld [smem:[#allocation0]]
  $region38: #{lstm_forward.1} parent=0
    _
  %s10 = ssub.s32 1, %s8
  %s11 = scalar_select 0, %s10, %s8
  // Predicated region
  $region2: #{lstm_forward.1} parent=0 // pred_check
    _
  $region3: #{lstm_forward.1} parent=0 // pred_check_branch
    %13 = sbr.rel (0) target = $region5
  $region4: #{lstm_forward.1} parent=0 // pred_region
    _
  $region5: #{lstm_forward.1} parent=0 // pred_fallthru
    _
  // Predicated region
  $region6: #{lstm_forward.1} parent=0 // pred_check
    _
  $region7: #{lstm_forward.1} parent=0 // pred_check_branch
    %15 = sbr.rel (0) target = $region9
  $region8: #{lstm_forward.1} parent=0 // pred_region
    _
  $region9: #{lstm_forward.1} parent=0 // pred_fallthru
    _
  // Predicated region
  $region10: #{lstm_forward.1} parent=0 // pred_check
    _
  $region11: #{lstm_forward.1} parent=0 // pred_check_branch
    %17 = sbr.rel (0) target = $region13
  $region12: #{lstm_forward.1} parent=0 // pred_region
    _
  $region13: #{lstm_forward.1} parent=0 // pred_fallthru
    _
  // Predicated region
  $region14: #{lstm_forward.1} parent=0 // pred_check
    _
  $region15: #{lstm_forward.1} parent=0 // pred_check_branch
    %19 = sbr.rel (0) target = $region17
  $region16: #{lstm_forward.1} parent=0 // pred_region
    _
  $region17: #{lstm_forward.1} parent=0 // pred_fallthru
    _
  // Predicated region
  $region18: #{lstm_forward.1} parent=0 // pred_check
    _
  $region19: #{lstm_forward.1} parent=0 // pred_check_branch
    %21 = sbr.rel (0) target = $region21
  $region20: #{lstm_forward.1} parent=0 // pred_region
    _
  $region21: #{lstm_forward.1} parent=0 // pred_fallthru
    _
  // Predicated region
  $region22: #{lstm_forward.1} parent=0 // pred_check
    _
  $region23: #{lstm_forward.1} parent=0 // pred_check_branch
    %23 = sbr.rel (0) target = $region25
  $region24: #{lstm_forward.1} parent=0 // pred_region
    _
  $region25: #{lstm_forward.1} parent=0 // pred_fallthru
    _
  // Predicated region
  $region26: #{lstm_forward.1} parent=0 // pred_check
    _
  $region27: #{lstm_forward.1} parent=0 // pred_check_branch
    %25 = sbr.rel (0) target = $region29
  $region28: #{lstm_forward.1} parent=0 // pred_region
    _
  $region29: #{lstm_forward.1} parent=0 // pred_fallthru
    _
  %v26 = vld [vmem:[%s0] sm:$0xff]
  %27 = vset.pattern.permute.xlu0 0
  %28 = vperm.xlu0 %27, %v26
  %v29 = vpop.permute.xlu0 %28
  %v30 = vlaneseq
  %v31 = vand.u32 %v30, 127
  %vm32 = vcmp.lt.s32.totalorder %v31, 32
  %v33 = vsel %vm32, 0, 7
  %v34 = vsel %vm32, 1, 4294967295
  %v35 = vadd.s32 %v31, 128
  %vm36 = vcmp.ge.s32.totalorder %v31, 128
  %vm37 = vcmp.ge.s32.totalorder %v35, 128
  %vm38 = vcmp.lt.s32.totalorder %v31, 192
  %vm39 = vcmp.lt.s32.totalorder %v35, 192
  %vm40 = vmand %vm36, %vm38
  %vm41 = vmand %vm37, %vm39
  %v42 = vld [vmem:[%s2] sm:$0xff]
  %v43 = vld [vmem:[%s2 + $0x8] sm:$0xff]
  %v44 = vld [vmem:[%s2 + $0x10] sm:$0xff]
  %v45 = vld [vmem:[%s2 + $0x18] sm:$0xff]
  %v46 = vld [vmem:[%s2 + $0x20] sm:$0xff]
  %v47 = vld [vmem:[%s2 + $0x28] sm:$0xff]
  %v48 = vld [vmem:[%s2 + $0x30] sm:$0xff]
  %v49 = vld [vmem:[%s2 + $0x38] sm:$0xff]
  %v50 = vld [vmem:[%s2 + $0x40] sm:$0xff]
  %v51 = vld [vmem:[%s2 + $0x48] sm:$0xff]
  %v52 = vld [vmem:[%s2 + $0x50] sm:$0xff]
  %v53 = vld [vmem:[%s2 + $0x58] sm:$0xff]
  %v54 = vld [vmem:[%s2 + $0x60] sm:$0xff]
  %v55 = vld [vmem:[%s2 + $0x68] sm:$0xff]
  %v56 = vld [vmem:[%s2 + $0x70] sm:$0xff]
  %v57 = vld [vmem:[%s2 + $0x78] sm:$0xff]
  %v58 = vld [vmem:[%s3] sm:$0xff]
  %v59 = vld [vmem:[%s4] sm:$0xff]
  %v60 = vld [vmem:[%s1] sm:$0xff]
  %v61 = vld [vmem:[%s1 + $0x8] sm:$0xff]
  %vm62 = vcmask 523264
  %v64 = vsel %vm62, %v58, 0
  %66 = vmatpush.msra.mxu0 0.0
  %67 = vmatpush.msra.mxu0 0.0
  %68 = vmatpush.msra.mxu0 0.0
  %69 = vmatpush.msra.mxu0 0.0
  %70 = vmatpush.msra.mxu0 0.0
  %71 = vmatpush.msra.mxu0 0.0
  %72 = vmatpush.msra.mxu0 0.0
  %73 = vmatpush.msra.mxu0 0.0
  %74 = vmatpush.msra.mxu0 %v56
  %75 = vmatpush.msra.mxu0 %v54
  %76 = vmatpush.msra.mxu0 %v52
  %77 = vmatpush.msra.mxu0 %v50
  %78 = vmatpush.msra.mxu0 %v48
  %79 = vmatpush.msra.mxu0 %v46
  %80 = vmatpush.msra.mxu0 %v44
  %81 = vmatpush.msra.mxu0 %v42
  %82 = vmatmul.f32.gmra.mxu0 %v64
  %v83 = vpop.f32.mrf.mxu0
  %v84 = vadd.f32 %v60, %v83
  %85 = vdwg.mxu0
  %86 = vmatpush.msra.mxu0 0.0
  %87 = vmatpush.msra.mxu0 0.0
  %88 = vmatpush.msra.mxu0 0.0
  %89 = vmatpush.msra.mxu0 0.0
  %90 = vmatpush.msra.mxu0 0.0
  %91 = vmatpush.msra.mxu0 0.0
  %92 = vmatpush.msra.mxu0 0.0
  %93 = vmatpush.msra.mxu0 0.0
  %94 = vmatpush.msra.mxu0 %v57
  %95 = vmatpush.msra.mxu0 %v55
  %96 = vmatpush.msra.mxu0 %v53
  %97 = vmatpush.msra.mxu0 %v51
  %98 = vmatpush.msra.mxu0 %v49
  %99 = vmatpush.msra.mxu0 %v47
  %100 = vmatpush.msra.mxu0 %v45
  %101 = vmatpush.msra.mxu0 %v43
  %102 = vmatmul.f32.gmra.mxu0 %v64
  %v103 = vpop.f32.mrf.mxu0
  %v104 = vadd.f32 %v61, %v103
  %105 = vdwg.mxu0
  %v106 = vtanh.pop %v84
  %v107 = vtanh.pop %v104
  %v108 = vxor.u32 %v84, 2147483648
  %v109 = vxor.u32 %v104, 2147483648
  %v110 = vmul.f32 %v108, 1.442695
  %v111 = vpow.pop %v110
  %v112 = vmul.f32 %v109, 1.442695
  %v113 = vpow.pop %v112
  %v114 = vadd.f32 %v111, 1.0
  %v115 = vadd.f32 %v113, 1.0
  %v116 = vrcp.pop %v114
  %v117 = vmul.f32 %v114, %v116
  %v118 = vsub.f32 1.0, %v117
  %v119 = vmul.f32 %v116, %v118
  %v120 = vadd.f32 %v116, %v119
  %vm121 = vweird.f32 %v114
  %vm122 = vweird.f32 %v116
  %vm123 = vmor %vm121, %vm122
  %v124 = vsel %vm123, %v116, %v120
  %v125 = vand.u32 2147483647, %v114
  %vm126 = vcmp.eq.f32.partialorder %v125, 8.507059e+37
  %v127 = vand.u32 %v114, 2147483648
  %v128 = vor.u32 1.1754944e-38, %v127
  %v129 = vsel %vm126, %v128, %v124
  %v130 = vmul.f32 1.0, %v129
  %v131 = vrcp.pop %v115
  %v132 = vmul.f32 %v115, %v131
  %v133 = vsub.f32 1.0, %v132
  %v134 = vmul.f32 %v131, %v133
  %v135 = vadd.f32 %v131, %v134
  %vm136 = vweird.f32 %v115
  %vm137 = vweird.f32 %v131
  %vm138 = vmor %vm136, %vm137
  %v139 = vsel %vm138, %v131, %v135
  %v140 = vand.u32 2147483647, %v115
  %vm141 = vcmp.eq.f32.partialorder %v140, 8.507059e+37
  %v142 = vand.u32 %v115, 2147483648
  %v143 = vor.u32 1.1754944e-38, %v142
  %v144 = vsel %vm141, %v143, %v139
  %v145 = vmul.f32 1.0, %v144
  %v146 = vsel %vm40, %v106, %v130
  %v147 = vsel %vm41, %v107, %v145
  %149 = vrot.lane.b32.xlu0 %v59, 64
  %v150 = vpop.permute.xlu0 %149
  %v152 = vmul.f32 %v146, %v150
  %v153 = vmul.f32 %v146, %v147
  %155 = vrot.lane.b32.xlu0 %v153, 64
  %v156 = vpop.permute.xlu0 %155
  %v158 = vadd.f32 %v152, %v156
  %v159 = vtanh.pop %v158
  %v160 = vmul.f32 %v147, %v159
  %vm161 = vcmp.lt.s32.totalorder %v33, %v29
  %163 = vrot.lane.b32.xlu0 %v160, 64
  %v164 = vpop.permute.xlu0 %163
  %v166 = vsel %vm161, %v164, %v58
  %168 = vrot.lane.b32.xlu0 %v158, 64
  %v169 = vpop.permute.xlu0 %168
  %v171 = vsel %vm161, %v169, %v59
  %v172 = vsel %vm161, %v164, 0.0
  %vm173 = vcmask 261120
  %174 = vst.msk [vmem:[#allocation2] sm:$0xff] %vm173, %v172
  %176 = vrot.lane.b32.xlu0 %v172, 96
  %v177 = vpop.permute.xlu0 %176
  %s179 = scalar_lea.vmem [#allocation3], 56
  %180 = vst.msk [vmem:[%s179] sm:$0xff] %vm173, %v177
  %s181 = scalar_lea.vmem %s1, 16
  %v182 = vld [vmem:[%s181] sm:$0xff]
  %v183 = vld [vmem:[%s181 + $0x8] sm:$0xff]
  %v185 = vsel %vm62, %v166, 0
  %187 = vmatpush.msra.mxu0 0.0
  %188 = vmatpush.msra.mxu0 0.0
  %189 = vmatpush.msra.mxu0 0.0
  %190 = vmatpush.msra.mxu0 0.0
  %191 = vmatpush.msra.mxu0 0.0
  %192 = vmatpush.msra.mxu0 0.0
  %193 = vmatpush.msra.mxu0 0.0
  %194 = vmatpush.msra.mxu0 0.0
  %195 = vmatpush.msra.mxu0 %v56
  %196 = vmatpush.msra.mxu0 %v54
  %197 = vmatpush.msra.mxu0 %v52
  %198 = vmatpush.msra.mxu0 %v50
  %199 = vmatpush.msra.mxu0 %v48
  %200 = vmatpush.msra.mxu0 %v46
  %201 = vmatpush.msra.mxu0 %v44
  %202 = vmatpush.msra.mxu0 %v42
  %203 = vmatmul.f32.gmra.mxu0 %v185
  %v204 = vpop.f32.mrf.mxu0
  %v205 = vadd.f32 %v182, %v204
  %206 = vdwg.mxu0
  %207 = vmatpush.msra.mxu0 0.0
  %208 = vmatpush.msra.mxu0 0.0
  %209 = vmatpush.msra.mxu0 0.0
  %210 = vmatpush.msra.mxu0 0.0
  %211 = vmatpush.msra.mxu0 0.0
  %212 = vmatpush.msra.mxu0 0.0
  %213 = vmatpush.msra.mxu0 0.0
  %214 = vmatpush.msra.mxu0 0.0
  %215 = vmatpush.msra.mxu0 %v57
  %216 = vmatpush.msra.mxu0 %v55
  %217 = vmatpush.msra.mxu0 %v53
  %218 = vmatpush.msra.mxu0 %v51
  %219 = vmatpush.msra.mxu0 %v49
  %220 = vmatpush.msra.mxu0 %v47
  %221 = vmatpush.msra.mxu0 %v45
  %222 = vmatpush.msra.mxu0 %v43
  %223 = vmatmul.f32.gmra.mxu0 %v185
  %v224 = vpop.f32.mrf.mxu0
  %v225 = vadd.f32 %v183, %v224
  %226 = vdwg.mxu0
  %v227 = vtanh.pop %v205
  %v228 = vtanh.pop %v225
  %v229 = vxor.u32 %v205, 2147483648
  %v230 = vxor.u32 %v225, 2147483648
  %v231 = vmul.f32 %v229, 1.442695
  %v232 = vpow.pop %v231
  %v233 = vmul.f32 %v230, 1.442695
  %v234 = vpow.pop %v233
  %v235 = vadd.f32 %v232, 1.0
  %v236 = vadd.f32 %v234, 1.0
  %v237 = vrcp.pop %v235
  %v238 = vmul.f32 %v235, %v237
  %v239 = vsub.f32 1.0, %v238
  %v240 = vmul.f32 %v237, %v239
  %v241 = vadd.f32 %v237, %v240
  %vm242 = vweird.f32 %v235
  %vm243 = vweird.f32 %v237
  %vm244 = vmor %vm242, %vm243
  %v245 = vsel %vm244, %v237, %v241
  %v246 = vand.u32 2147483647, %v235
  %vm247 = vcmp.eq.f32.partialorder %v246, 8.507059e+37
  %v248 = vand.u32 %v235, 2147483648
  %v249 = vor.u32 1.1754944e-38, %v248
  %v250 = vsel %vm247, %v249, %v245
  %v251 = vmul.f32 1.0, %v250
  %v252 = vrcp.pop %v236
  %v253 = vmul.f32 %v236, %v252
  %v254 = vsub.f32 1.0, %v253
  %v255 = vmul.f32 %v252, %v254
  %v256 = vadd.f32 %v252, %v255
  %vm257 = vweird.f32 %v236
  %vm258 = vweird.f32 %v252
  %vm259 = vmor %vm257, %vm258
  %v260 = vsel %vm259, %v252, %v256
  %v261 = vand.u32 2147483647, %v236
  %vm262 = vcmp.eq.f32.partialorder %v261, 8.507059e+37
  %v263 = vand.u32 %v236, 2147483648
  %v264 = vor.u32 1.1754944e-38, %v263
  %v265 = vsel %vm262, %v264, %v260
  %v266 = vmul.f32 1.0, %v265
  %v267 = vsel %vm40, %v227, %v251
  %v268 = vsel %vm41, %v228, %v266
  %270 = vrot.lane.b32.xlu0 %v171, 64
  %v271 = vpop.permute.xlu0 %270
  %v273 = vmul.f32 %v267, %v271
  %v274 = vmul.f32 %v267, %v268
  %276 = vrot.lane.b32.xlu0 %v274, 64
  %v277 = vpop.permute.xlu0 %276
  %v279 = vadd.f32 %v273, %v277
  %v280 = vtanh.pop %v279
  %v281 = vmul.f32 %v268, %v280
  %v282 = vadd.s32 %v33, %v34
  %vm283 = vcmp.lt.s32.totalorder %v282, %v29
  %285 = vrot.lane.b32.xlu0 %v281, 64
  %v286 = vpop.permute.xlu0 %285
  %v288 = vsel %vm283, %v286, %v166
  %290 = vrot.lane.b32.xlu0 %v279, 64
  %v291 = vpop.permute.xlu0 %290
  %v293 = vsel %vm283, %v291, %v171
  %v294 = vsel %vm283, %v286, 0.0
  %s295 = scalar_lea.vmem [#allocation2], 8
  %296 = vst.msk [vmem:[%s295] sm:$0xff] %vm173, %v294
  %298 = vrot.lane.b32.xlu0 %v294, 96
  %v299 = vpop.permute.xlu0 %298
  %s301 = scalar_lea.vmem [#allocation3], 48
  %302 = vst.msk [vmem:[%s301] sm:$0xff] %vm173, %v299
  %s303 = scalar_lea.vmem %s1, 32
  %v304 = vld [vmem:[%s303] sm:$0xff]
  %v305 = vld [vmem:[%s303 + $0x8] sm:$0xff]
  %v307 = vsel %vm62, %v288, 0
  %309 = vmatpush.msra.mxu0 0.0
  %310 = vmatpush.msra.mxu0 0.0
  %311 = vmatpush.msra.mxu0 0.0
  %312 = vmatpush.msra.mxu0 0.0
  %313 = vmatpush.msra.mxu0 0.0
  %314 = vmatpush.msra.mxu0 0.0
  %315 = vmatpush.msra.mxu0 0.0
  %316 = vmatpush.msra.mxu0 0.0
  %317 = vmatpush.msra.mxu0 %v56
  %318 = vmatpush.msra.mxu0 %v54
  %319 = vmatpush.msra.mxu0 %v52
  %320 = vmatpush.msra.mxu0 %v50
  %321 = vmatpush.msra.mxu0 %v48
  %322 = vmatpush.msra.mxu0 %v46
  %323 = vmatpush.msra.mxu0 %v44
  %324 = vmatpush.msra.mxu0 %v42
  %325 = vmatmul.f32.gmra.mxu0 %v307
  %v326 = vpop.f32.mrf.mxu0
  %v327 = vadd.f32 %v304, %v326
  %328 = vdwg.mxu0
  %329 = vmatpush.msra.mxu0 0.0
  %330 = vmatpush.msra.mxu0 0.0
  %331 = vmatpush.msra.mxu0 0.0
  %332 = vmatpush.msra.mxu0 0.0
  %333 = vmatpush.msra.mxu0 0.0
  %334 = vmatpush.msra.mxu0 0.0
  %335 = vmatpush.msra.mxu0 0.0
  %336 = vmatpush.msra.mxu0 0.0
  %337 = vmatpush.msra.mxu0 %v57
  %338 = vmatpush.msra.mxu0 %v55
  %339 = vmatpush.msra.mxu0 %v53
  %340 = vmatpush.msra.mxu0 %v51
  %341 = vmatpush.msra.mxu0 %v49
  %342 = vmatpush.msra.mxu0 %v47
  %343 = vmatpush.msra.mxu0 %v45
  %344 = vmatpush.msra.mxu0 %v43
  %345 = vmatmul.f32.gmra.mxu0 %v307
  %v346 = vpop.f32.mrf.mxu0
  %v347 = vadd.f32 %v305, %v346
  %348 = vdwg.mxu0
  %v349 = vtanh.pop %v327
  %v350 = vtanh.pop %v347
  %v351 = vxor.u32 %v327, 2147483648
  %v352 = vxor.u32 %v347, 2147483648
  %v353 = vmul.f32 %v351, 1.442695
  %v354 = vpow.pop %v353
  %v355 = vmul.f32 %v352, 1.442695
  %v356 = vpow.pop %v355
  %v357 = vadd.f32 %v354, 1.0
  %v358 = vadd.f32 %v356, 1.0
  %v359 = vrcp.pop %v357
  %v360 = vmul.f32 %v357, %v359
  %v361 = vsub.f32 1.0, %v360
  %v362 = vmul.f32 %v359, %v361
  %v363 = vadd.f32 %v359, %v362
  %vm364 = vweird.f32 %v357
  %vm365 = vweird.f32 %v359
  %vm366 = vmor %vm364, %vm365
  %v367 = vsel %vm366, %v359, %v363
  %v368 = vand.u32 2147483647, %v357
  %vm369 = vcmp.eq.f32.partialorder %v368, 8.507059e+37
  %v370 = vand.u32 %v357, 2147483648
  %v371 = vor.u32 1.1754944e-38, %v370
  %v372 = vsel %vm369, %v371, %v367
  %v373 = vmul.f32 1.0, %v372
  %v374 = vrcp.pop %v358
  %v375 = vmul.f32 %v358, %v374
  %v376 = vsub.f32 1.0, %v375
  %v377 = vmul.f32 %v374, %v376
  %v378 = vadd.f32 %v374, %v377
  %vm379 = vweird.f32 %v358
  %vm380 = vweird.f32 %v374
  %vm381 = vmor %vm379, %vm380
  %v382 = vsel %vm381, %v374, %v378
  %v383 = vand.u32 2147483647, %v358
  %vm384 = vcmp.eq.f32.partialorder %v383, 8.507059e+37
  %v385 = vand.u32 %v358, 2147483648
  %v386 = vor.u32 1.1754944e-38, %v385
  %v387 = vsel %vm384, %v386, %v382
  %v388 = vmul.f32 1.0, %v387
  %v389 = vsel %vm40, %v349, %v373
  %v390 = vsel %vm41, %v350, %v388
  %392 = vrot.lane.b32.xlu0 %v293, 64
  %v393 = vpop.permute.xlu0 %392
  %v395 = vmul.f32 %v389, %v393
  %v396 = vmul.f32 %v389, %v390
  %398 = vrot.lane.b32.xlu0 %v396, 64
  %v399 = vpop.permute.xlu0 %398
  %v401 = vadd.f32 %v395, %v399
  %v402 = vtanh.pop %v401
  %v403 = vmul.f32 %v390, %v402
  %v404 = vmul.u32 %v34, 2
  %v405 = vadd.s32 %v33, %v404
  %vm406 = vcmp.lt.s32.totalorder %v405, %v29
  %408 = vrot.lane.b32.xlu0 %v403, 64
  %v409 = vpop.permute.xlu0 %408
  %v411 = vsel %vm406, %v409, %v288
  %413 = vrot.lane.b32.xlu0 %v401, 64
  %v414 = vpop.permute.xlu0 %413
  %v416 = vsel %vm406, %v414, %v293
  %v417 = vsel %vm406, %v409, 0.0
  %s418 = scalar_lea.vmem [#allocation2], 16
  %419 = vst.msk [vmem:[%s418] sm:$0xff] %vm173, %v417
  %421 = vrot.lane.b32.xlu0 %v417, 96
  %v422 = vpop.permute.xlu0 %421
  %s424 = scalar_lea.vmem [#allocation3], 40
  %425 = vst.msk [vmem:[%s424] sm:$0xff] %vm173, %v422
  %s426 = scalar_lea.vmem %s1, 48
  %v427 = vld [vmem:[%s426] sm:$0xff]
  %v428 = vld [vmem:[%s426 + $0x8] sm:$0xff]
  %v430 = vsel %vm62, %v411, 0
  %432 = vmatpush.msra.mxu0 0.0
  %433 = vmatpush.msra.mxu0 0.0
  %434 = vmatpush.msra.mxu0 0.0
  %435 = vmatpush.msra.mxu0 0.0
  %436 = vmatpush.msra.mxu0 0.0
  %437 = vmatpush.msra.mxu0 0.0
  %438 = vmatpush.msra.mxu0 0.0
  %439 = vmatpush.msra.mxu0 0.0
  %440 = vmatpush.msra.mxu0 %v56
  %441 = vmatpush.msra.mxu0 %v54
  %442 = vmatpush.msra.mxu0 %v52
  %443 = vmatpush.msra.mxu0 %v50
  %444 = vmatpush.msra.mxu0 %v48
  %445 = vmatpush.msra.mxu0 %v46
  %446 = vmatpush.msra.mxu0 %v44
  %447 = vmatpush.msra.mxu0 %v42
  %448 = vmatmul.f32.gmra.mxu0 %v430
  %v449 = vpop.f32.mrf.mxu0
  %v450 = vadd.f32 %v427, %v449
  %451 = vdwg.mxu0
  %452 = vmatpush.msra.mxu0 0.0
  %453 = vmatpush.msra.mxu0 0.0
  %454 = vmatpush.msra.mxu0 0.0
  %455 = vmatpush.msra.mxu0 0.0
  %456 = vmatpush.msra.mxu0 0.0
  %457 = vmatpush.msra.mxu0 0.0
  %458 = vmatpush.msra.mxu0 0.0
  %459 = vmatpush.msra.mxu0 0.0
  %460 = vmatpush.msra.mxu0 %v57
  %461 = vmatpush.msra.mxu0 %v55
  %462 = vmatpush.msra.mxu0 %v53
  %463 = vmatpush.msra.mxu0 %v51
  %464 = vmatpush.msra.mxu0 %v49
  %465 = vmatpush.msra.mxu0 %v47
  %466 = vmatpush.msra.mxu0 %v45
  %467 = vmatpush.msra.mxu0 %v43
  %468 = vmatmul.f32.gmra.mxu0 %v430
  %v469 = vpop.f32.mrf.mxu0
  %v470 = vadd.f32 %v428, %v469
  %471 = vdwg.mxu0
  %v472 = vtanh.pop %v450
  %v473 = vtanh.pop %v470
  %v474 = vxor.u32 %v450, 2147483648
  %v475 = vxor.u32 %v470, 2147483648
  %v476 = vmul.f32 %v474, 1.442695
  %v477 = vpow.pop %v476
  %v478 = vmul.f32 %v475, 1.442695
  %v479 = vpow.pop %v478
  %v480 = vadd.f32 %v477, 1.0
  %v481 = vadd.f32 %v479, 1.0
  %v482 = vrcp.pop %v480
  %v483 = vmul.f32 %v480, %v482
  %v484 = vsub.f32 1.0, %v483
  %v485 = vmul.f32 %v482, %v484
  %v486 = vadd.f32 %v482, %v485
  %vm487 = vweird.f32 %v480
  %vm488 = vweird.f32 %v482
  %vm489 = vmor %vm487, %vm488
  %v490 = vsel %vm489, %v482, %v486
  %v491 = vand.u32 2147483647, %v480
  %vm492 = vcmp.eq.f32.partialorder %v491, 8.507059e+37
  %v493 = vand.u32 %v480, 2147483648
  %v494 = vor.u32 1.1754944e-38, %v493
  %v495 = vsel %vm492, %v494, %v490
  %v496 = vmul.f32 1.0, %v495
  %v497 = vrcp.pop %v481
  %v498 = vmul.f32 %v481, %v497
  %v499 = vsub.f32 1.0, %v498
  %v500 = vmul.f32 %v497, %v499
  %v501 = vadd.f32 %v497, %v500
  %vm502 = vweird.f32 %v481
  %vm503 = vweird.f32 %v497
  %vm504 = vmor %vm502, %vm503
  %v505 = vsel %vm504, %v497, %v501
  %v506 = vand.u32 2147483647, %v481
  %vm507 = vcmp.eq.f32.partialorder %v506, 8.507059e+37
  %v508 = vand.u32 %v481, 2147483648
  %v509 = vor.u32 1.1754944e-38, %v508
  %v510 = vsel %vm507, %v509, %v505
  %v511 = vmul.f32 1.0, %v510
  %v512 = vsel %vm40, %v472, %v496
  %v513 = vsel %vm41, %v473, %v511
  %515 = vrot.lane.b32.xlu0 %v416, 64
  %v516 = vpop.permute.xlu0 %515
  %v518 = vmul.f32 %v512, %v516
  %v519 = vmul.f32 %v512, %v513
  %521 = vrot.lane.b32.xlu0 %v519, 64
  %v522 = vpop.permute.xlu0 %521
  %v524 = vadd.f32 %v518, %v522
  %v525 = vtanh.pop %v524
  %v526 = vmul.f32 %v513, %v525
  %v527 = vmul.u32 %v34, 3
  %v528 = vadd.s32 %v33, %v527
  %vm529 = vcmp.lt.s32.totalorder %v528, %v29
  %531 = vrot.lane.b32.xlu0 %v526, 64
  %v532 = vpop.permute.xlu0 %531
  %v534 = vsel %vm529, %v532, %v411
  %536 = vrot.lane.b32.xlu0 %v524, 64
  %v537 = vpop.permute.xlu0 %536
  %v539 = vsel %vm529, %v537, %v416
  %v540 = vsel %vm529, %v532, 0.0
  %s541 = scalar_lea.vmem [#allocation2], 24
  %542 = vst.msk [vmem:[%s541] sm:$0xff] %vm173, %v540
  %544 = vrot.lane.b32.xlu0 %v540, 96
  %v545 = vpop.permute.xlu0 %544
  %s547 = scalar_lea.vmem [#allocation3], 32
  %548 = vst.msk [vmem:[%s547] sm:$0xff] %vm173, %v545
  %s549 = scalar_lea.vmem %s1, 64
  %v550 = vld [vmem:[%s549] sm:$0xff]
  %v551 = vld [vmem:[%s549 + $0x8] sm:$0xff]
  %v553 = vsel %vm62, %v534, 0
  %555 = vmatpush.msra.mxu0 0.0
  %556 = vmatpush.msra.mxu0 0.0
  %557 = vmatpush.msra.mxu0 0.0
  %558 = vmatpush.msra.mxu0 0.0
  %559 = vmatpush.msra.mxu0 0.0
  %560 = vmatpush.msra.mxu0 0.0
  %561 = vmatpush.msra.mxu0 0.0
  %562 = vmatpush.msra.mxu0 0.0
  %563 = vmatpush.msra.mxu0 %v56
  %564 = vmatpush.msra.mxu0 %v54
  %565 = vmatpush.msra.mxu0 %v52
  %566 = vmatpush.msra.mxu0 %v50
  %567 = vmatpush.msra.mxu0 %v48
  %568 = vmatpush.msra.mxu0 %v46
  %569 = vmatpush.msra.mxu0 %v44
  %570 = vmatpush.msra.mxu0 %v42
  %571 = vmatmul.f32.gmra.mxu0 %v553
  %v572 = vpop.f32.mrf.mxu0
  %v573 = vadd.f32 %v550, %v572
  %574 = vdwg.mxu0
  %575 = vmatpush.msra.mxu0 0.0
  %576 = vmatpush.msra.mxu0 0.0
  %577 = vmatpush.msra.mxu0 0.0
  %578 = vmatpush.msra.mxu0 0.0
  %579 = vmatpush.msra.mxu0 0.0
  %580 = vmatpush.msra.mxu0 0.0
  %581 = vmatpush.msra.mxu0 0.0
  %582 = vmatpush.msra.mxu0 0.0
  %583 = vmatpush.msra.mxu0 %v57
  %584 = vmatpush.msra.mxu0 %v55
  %585 = vmatpush.msra.mxu0 %v53
  %586 = vmatpush.msra.mxu0 %v51
  %587 = vmatpush.msra.mxu0 %v49
  %588 = vmatpush.msra.mxu0 %v47
  %589 = vmatpush.msra.mxu0 %v45
  %590 = vmatpush.msra.mxu0 %v43
  %591 = vmatmul.f32.gmra.mxu0 %v553
  %v592 = vpop.f32.mrf.mxu0
  %v593 = vadd.f32 %v551, %v592
  %594 = vdwg.mxu0
  %v595 = vtanh.pop %v573
  %v596 = vtanh.pop %v593
  %v597 = vxor.u32 %v573, 2147483648
  %v598 = vxor.u32 %v593, 2147483648
  %v599 = vmul.f32 %v597, 1.442695
  %v600 = vpow.pop %v599
  %v601 = vmul.f32 %v598, 1.442695
  %v602 = vpow.pop %v601
  %v603 = vadd.f32 %v600, 1.0
  %v604 = vadd.f32 %v602, 1.0
  %v605 = vrcp.pop %v603
  %v606 = vmul.f32 %v603, %v605
  %v607 = vsub.f32 1.0, %v606
  %v608 = vmul.f32 %v605, %v607
  %v609 = vadd.f32 %v605, %v608
  %vm610 = vweird.f32 %v603
  %vm611 = vweird.f32 %v605
  %vm612 = vmor %vm610, %vm611
  %v613 = vsel %vm612, %v605, %v609
  %v614 = vand.u32 2147483647, %v603
  %vm615 = vcmp.eq.f32.partialorder %v614, 8.507059e+37
  %v616 = vand.u32 %v603, 2147483648
  %v617 = vor.u32 1.1754944e-38, %v616
  %v618 = vsel %vm615, %v617, %v613
  %v619 = vmul.f32 1.0, %v618
  %v620 = vrcp.pop %v604
  %v621 = vmul.f32 %v604, %v620
  %v622 = vsub.f32 1.0, %v621
  %v623 = vmul.f32 %v620, %v622
  %v624 = vadd.f32 %v620, %v623
  %vm625 = vweird.f32 %v604
  %vm626 = vweird.f32 %v620
  %vm627 = vmor %vm625, %vm626
  %v628 = vsel %vm627, %v620, %v624
  %v629 = vand.u32 2147483647, %v604
  %vm630 = vcmp.eq.f32.partialorder %v629, 8.507059e+37
  %v631 = vand.u32 %v604, 2147483648
  %v632 = vor.u32 1.1754944e-38, %v631
  %v633 = vsel %vm630, %v632, %v628
  %v634 = vmul.f32 1.0, %v633
  %v635 = vsel %vm40, %v595, %v619
  %v636 = vsel %vm41, %v596, %v634
  %638 = vrot.lane.b32.xlu0 %v539, 64
  %v639 = vpop.permute.xlu0 %638
  %v641 = vmul.f32 %v635, %v639
  %v642 = vmul.f32 %v635, %v636
  %644 = vrot.lane.b32.xlu0 %v642, 64
  %v645 = vpop.permute.xlu0 %644
  %v647 = vadd.f32 %v641, %v645
  %v648 = vtanh.pop %v647
  %v649 = vmul.f32 %v636, %v648
  %v650 = vmul.u32 %v34, 4
  %v651 = vadd.s32 %v33, %v650
  %vm652 = vcmp.lt.s32.totalorder %v651, %v29
  %654 = vrot.lane.b32.xlu0 %v649, 64
  %v655 = vpop.permute.xlu0 %654
  %v657 = vsel %vm652, %v655, %v534
  %659 = vrot.lane.b32.xlu0 %v647, 64
  %v660 = vpop.permute.xlu0 %659
  %v662 = vsel %vm652, %v660, %v539
  %v663 = vsel %vm652, %v655, 0.0
  %s664 = scalar_lea.vmem [#allocation2], 32
  %665 = vst.msk [vmem:[%s664] sm:$0xff] %vm173, %v663
  %667 = vrot.lane.b32.xlu0 %v663, 96
  %v668 = vpop.permute.xlu0 %667
  %s670 = scalar_lea.vmem [#allocation3], 24
  %671 = vst.msk [vmem:[%s670] sm:$0xff] %vm173, %v668
  %s672 = scalar_lea.vmem %s1, 80
  %v673 = vld [vmem:[%s672] sm:$0xff]
  %v674 = vld [vmem:[%s672 + $0x8] sm:$0xff]
  %v676 = vsel %vm62, %v657, 0
  %678 = vmatpush.msra.mxu0 0.0
  %679 = vmatpush.msra.mxu0 0.0
  %680 = vmatpush.msra.mxu0 0.0
  %681 = vmatpush.msra.mxu0 0.0
  %682 = vmatpush.msra.mxu0 0.0
  %683 = vmatpush.msra.mxu0 0.0
  %684 = vmatpush.msra.mxu0 0.0
  %685 = vmatpush.msra.mxu0 0.0
  %686 = vmatpush.msra.mxu0 %v56
  %687 = vmatpush.msra.mxu0 %v54
  %688 = vmatpush.msra.mxu0 %v52
  %689 = vmatpush.msra.mxu0 %v50
  %690 = vmatpush.msra.mxu0 %v48
  %691 = vmatpush.msra.mxu0 %v46
  %692 = vmatpush.msra.mxu0 %v44
  %693 = vmatpush.msra.mxu0 %v42
  %694 = vmatmul.f32.gmra.mxu0 %v676
  %v695 = vpop.f32.mrf.mxu0
  %v696 = vadd.f32 %v673, %v695
  %697 = vdwg.mxu0
  %698 = vmatpush.msra.mxu0 0.0
  %699 = vmatpush.msra.mxu0 0.0
  %700 = vmatpush.msra.mxu0 0.0
  %701 = vmatpush.msra.mxu0 0.0
  %702 = vmatpush.msra.mxu0 0.0
  %703 = vmatpush.msra.mxu0 0.0
  %704 = vmatpush.msra.mxu0 0.0
  %705 = vmatpush.msra.mxu0 0.0
  %706 = vmatpush.msra.mxu0 %v57
  %707 = vmatpush.msra.mxu0 %v55
  %708 = vmatpush.msra.mxu0 %v53
  %709 = vmatpush.msra.mxu0 %v51
  %710 = vmatpush.msra.mxu0 %v49
  %711 = vmatpush.msra.mxu0 %v47
  %712 = vmatpush.msra.mxu0 %v45
  %713 = vmatpush.msra.mxu0 %v43
  %714 = vmatmul.f32.gmra.mxu0 %v676
  %v715 = vpop.f32.mrf.mxu0
  %v716 = vadd.f32 %v674, %v715
  %717 = vdwg.mxu0
  %v718 = vtanh.pop %v696
  %v719 = vtanh.pop %v716
  %v720 = vxor.u32 %v696, 2147483648
  %v721 = vxor.u32 %v716, 2147483648
  %v722 = vmul.f32 %v720, 1.442695
  %v723 = vpow.pop %v722
  %v724 = vmul.f32 %v721, 1.442695
  %v725 = vpow.pop %v724
  %v726 = vadd.f32 %v723, 1.0
  %v727 = vadd.f32 %v725, 1.0
  %v728 = vrcp.pop %v726
  %v729 = vmul.f32 %v726, %v728
  %v730 = vsub.f32 1.0, %v729
  %v731 = vmul.f32 %v728, %v730
  %v732 = vadd.f32 %v728, %v731
  %vm733 = vweird.f32 %v726
  %vm734 = vweird.f32 %v728
  %vm735 = vmor %vm733, %vm734
  %v736 = vsel %vm735, %v728, %v732
  %v737 = vand.u32 2147483647, %v726
  %vm738 = vcmp.eq.f32.partialorder %v737, 8.507059e+37
  %v739 = vand.u32 %v726, 2147483648
  %v740 = vor.u32 1.1754944e-38, %v739
  %v741 = vsel %vm738, %v740, %v736
  %v742 = vmul.f32 1.0, %v741
  %v743 = vrcp.pop %v727
  %v744 = vmul.f32 %v727, %v743
  %v745 = vsub.f32 1.0, %v744
  %v746 = vmul.f32 %v743, %v745
  %v747 = vadd.f32 %v743, %v746
  %vm748 = vweird.f32 %v727
  %vm749 = vweird.f32 %v743
  %vm750 = vmor %vm748, %vm749
  %v751 = vsel %vm750, %v743, %v747
  %v752 = vand.u32 2147483647, %v727
  %vm753 = vcmp.eq.f32.partialorder %v752, 8.507059e+37
  %v754 = vand.u32 %v727, 2147483648
  %v755 = vor.u32 1.1754944e-38, %v754
  %v756 = vsel %vm753, %v755, %v751
  %v757 = vmul.f32 1.0, %v756
  %v758 = vsel %vm40, %v718, %v742
  %v759 = vsel %vm41, %v719, %v757
  %761 = vrot.lane.b32.xlu0 %v662, 64
  %v762 = vpop.permute.xlu0 %761
  %v764 = vmul.f32 %v758, %v762
  %v765 = vmul.f32 %v758, %v759
  %767 = vrot.lane.b32.xlu0 %v765, 64
  %v768 = vpop.permute.xlu0 %767
  %v770 = vadd.f32 %v764, %v768
  %v771 = vtanh.pop %v770
  %v772 = vmul.f32 %v759, %v771
  %v773 = vmul.u32 %v34, 5
  %v774 = vadd.s32 %v33, %v773
  %vm775 = vcmp.lt.s32.totalorder %v774, %v29
  %777 = vrot.lane.b32.xlu0 %v772, 64
  %v778 = vpop.permute.xlu0 %777
  %v780 = vsel %vm775, %v778, %v657
  %782 = vrot.lane.b32.xlu0 %v770, 64
  %v783 = vpop.permute.xlu0 %782
  %v785 = vsel %vm775, %v783, %v662
  %v786 = vsel %vm775, %v778, 0.0
  %s787 = scalar_lea.vmem [#allocation2], 40
  %788 = vst.msk [vmem:[%s787] sm:$0xff] %vm173, %v786
  %790 = vrot.lane.b32.xlu0 %v786, 96
  %v791 = vpop.permute.xlu0 %790
  %s793 = scalar_lea.vmem [#allocation3], 16
  %794 = vst.msk [vmem:[%s793] sm:$0xff] %vm173, %v791
  %s795 = scalar_lea.vmem %s1, 96
  %v796 = vld [vmem:[%s795] sm:$0xff]
  %v797 = vld [vmem:[%s795 + $0x8] sm:$0xff]
  %v799 = vsel %vm62, %v780, 0
  %801 = vmatpush.msra.mxu0 0.0
  %802 = vmatpush.msra.mxu0 0.0
  %803 = vmatpush.msra.mxu0 0.0
  %804 = vmatpush.msra.mxu0 0.0
  %805 = vmatpush.msra.mxu0 0.0
  %806 = vmatpush.msra.mxu0 0.0
  %807 = vmatpush.msra.mxu0 0.0
  %808 = vmatpush.msra.mxu0 0.0
  %809 = vmatpush.msra.mxu0 %v56
  %810 = vmatpush.msra.mxu0 %v54
  %811 = vmatpush.msra.mxu0 %v52
  %812 = vmatpush.msra.mxu0 %v50
  %813 = vmatpush.msra.mxu0 %v48
  %814 = vmatpush.msra.mxu0 %v46
  %815 = vmatpush.msra.mxu0 %v44
  %816 = vmatpush.msra.mxu0 %v42
  %817 = vmatmul.f32.gmra.mxu0 %v799
  %v818 = vpop.f32.mrf.mxu0
  %v819 = vadd.f32 %v796, %v818
  %820 = vdwg.mxu0
  %821 = vmatpush.msra.mxu0 0.0
  %822 = vmatpush.msra.mxu0 0.0
  %823 = vmatpush.msra.mxu0 0.0
  %824 = vmatpush.msra.mxu0 0.0
  %825 = vmatpush.msra.mxu0 0.0
  %826 = vmatpush.msra.mxu0 0.0
  %827 = vmatpush.msra.mxu0 0.0
  %828 = vmatpush.msra.mxu0 0.0
  %829 = vmatpush.msra.mxu0 %v57
  %830 = vmatpush.msra.mxu0 %v55
  %831 = vmatpush.msra.mxu0 %v53
  %832 = vmatpush.msra.mxu0 %v51
  %833 = vmatpush.msra.mxu0 %v49
  %834 = vmatpush.msra.mxu0 %v47
  %835 = vmatpush.msra.mxu0 %v45
  %836 = vmatpush.msra.mxu0 %v43
  %837 = vmatmul.f32.gmra.mxu0 %v799
  %v838 = vpop.f32.mrf.mxu0
  %v839 = vadd.f32 %v797, %v838
  %840 = vdwg.mxu0
  %v841 = vtanh.pop %v819
  %v842 = vtanh.pop %v839
  %v843 = vxor.u32 %v819, 2147483648
  %v844 = vxor.u32 %v839, 2147483648
  %v845 = vmul.f32 %v843, 1.442695
  %v846 = vpow.pop %v845
  %v847 = vmul.f32 %v844, 1.442695
  %v848 = vpow.pop %v847
  %v849 = vadd.f32 %v846, 1.0
  %v850 = vadd.f32 %v848, 1.0
  %v851 = vrcp.pop %v849
  %v852 = vmul.f32 %v849, %v851
  %v853 = vsub.f32 1.0, %v852
  %v854 = vmul.f32 %v851, %v853
  %v855 = vadd.f32 %v851, %v854
  %vm856 = vweird.f32 %v849
  %vm857 = vweird.f32 %v851
  %vm858 = vmor %vm856, %vm857
  %v859 = vsel %vm858, %v851, %v855
  %v860 = vand.u32 2147483647, %v849
  %vm861 = vcmp.eq.f32.partialorder %v860, 8.507059e+37
  %v862 = vand.u32 %v849, 2147483648
  %v863 = vor.u32 1.1754944e-38, %v862
  %v864 = vsel %vm861, %v863, %v859
  %v865 = vmul.f32 1.0, %v864
  %v866 = vrcp.pop %v850
  %v867 = vmul.f32 %v850, %v866
  %v868 = vsub.f32 1.0, %v867
  %v869 = vmul.f32 %v866, %v868
  %v870 = vadd.f32 %v866, %v869
  %vm871 = vweird.f32 %v850
  %vm872 = vweird.f32 %v866
  %vm873 = vmor %vm871, %vm872
  %v874 = vsel %vm873, %v866, %v870
  %v875 = vand.u32 2147483647, %v850
  %vm876 = vcmp.eq.f32.partialorder %v875, 8.507059e+37
  %v877 = vand.u32 %v850, 2147483648
  %v878 = vor.u32 1.1754944e-38, %v877
  %v879 = vsel %vm876, %v878, %v874
  %v880 = vmul.f32 1.0, %v879
  %v881 = vsel %vm40, %v841, %v865
  %v882 = vsel %vm41, %v842, %v880
  %884 = vrot.lane.b32.xlu0 %v785, 64
  %v885 = vpop.permute.xlu0 %884
  %v887 = vmul.f32 %v881, %v885
  %v888 = vmul.f32 %v881, %v882
  %890 = vrot.lane.b32.xlu0 %v888, 64
  %v891 = vpop.permute.xlu0 %890
  %v893 = vadd.f32 %v887, %v891
  %v894 = vtanh.pop %v893
  %v895 = vmul.f32 %v882, %v894
  %v896 = vmul.u32 %v34, 6
  %v897 = vadd.s32 %v33, %v896
  %vm898 = vcmp.lt.s32.totalorder %v897, %v29
  %900 = vrot.lane.b32.xlu0 %v895, 64
  %v901 = vpop.permute.xlu0 %900
  %v903 = vsel %vm898, %v901, %v780
  %905 = vrot.lane.b32.xlu0 %v893, 64
  %v906 = vpop.permute.xlu0 %905
  %v908 = vsel %vm898, %v906, %v785
  %v909 = vsel %vm898, %v901, 0.0
  %s910 = scalar_lea.vmem [#allocation2], 48
  %911 = vst.msk [vmem:[%s910] sm:$0xff] %vm173, %v909
  %913 = vrot.lane.b32.xlu0 %v909, 96
  %v914 = vpop.permute.xlu0 %913
  %s916 = scalar_lea.vmem [#allocation3], 8
  %917 = vst.msk [vmem:[%s916] sm:$0xff] %vm173, %v914
  %s918 = scalar_lea.vmem %s1, 112
  %v919 = vld [vmem:[%s918] sm:$0xff]
  %v920 = vld [vmem:[%s918 + $0x8] sm:$0xff]
  %v922 = vsel %vm62, %v903, 0
  %924 = vmatpush.msra.mxu0 0.0
  %925 = vmatpush.msra.mxu0 0.0
  %926 = vmatpush.msra.mxu0 0.0
  %927 = vmatpush.msra.mxu0 0.0
  %928 = vmatpush.msra.mxu0 0.0
  %929 = vmatpush.msra.mxu0 0.0
  %930 = vmatpush.msra.mxu0 0.0
  %931 = vmatpush.msra.mxu0 0.0
  %932 = vmatpush.msra.mxu0 %v56
  %933 = vmatpush.msra.mxu0 %v54
  %934 = vmatpush.msra.mxu0 %v52
  %935 = vmatpush.msra.mxu0 %v50
  %936 = vmatpush.msra.mxu0 %v48
  %937 = vmatpush.msra.mxu0 %v46
  %938 = vmatpush.msra.mxu0 %v44
  %939 = vmatpush.msra.mxu0 %v42
  %940 = vmatmul.f32.gmra.mxu0 %v922
  %v941 = vpop.f32.mrf.mxu0
  %v942 = vadd.f32 %v919, %v941
  %943 = vdwg.mxu0
  %944 = vmatpush.msra.mxu0 0.0
  %945 = vmatpush.msra.mxu0 0.0
  %946 = vmatpush.msra.mxu0 0.0
  %947 = vmatpush.msra.mxu0 0.0
  %948 = vmatpush.msra.mxu0 0.0
  %949 = vmatpush.msra.mxu0 0.0
  %950 = vmatpush.msra.mxu0 0.0
  %951 = vmatpush.msra.mxu0 0.0
  %952 = vmatpush.msra.mxu0 %v57
  %953 = vmatpush.msra.mxu0 %v55
  %954 = vmatpush.msra.mxu0 %v53
  %955 = vmatpush.msra.mxu0 %v51
  %956 = vmatpush.msra.mxu0 %v49
  %957 = vmatpush.msra.mxu0 %v47
  %958 = vmatpush.msra.mxu0 %v45
  %959 = vmatpush.msra.mxu0 %v43
  %960 = vmatmul.f32.gmra.mxu0 %v922
  %v961 = vpop.f32.mrf.mxu0
  %v962 = vadd.f32 %v920, %v961
  %963 = vdwg.mxu0
  %v964 = vtanh.pop %v942
  %v965 = vtanh.pop %v962
  %v966 = vxor.u32 %v942, 2147483648
  %v967 = vxor.u32 %v962, 2147483648
  %v968 = vmul.f32 %v966, 1.442695
  %v969 = vpow.pop %v968
  %v970 = vmul.f32 %v967, 1.442695
  %v971 = vpow.pop %v970
  %v972 = vadd.f32 %v969, 1.0
  %v973 = vadd.f32 %v971, 1.0
  %v974 = vrcp.pop %v972
  %v975 = vmul.f32 %v972, %v974
  %v976 = vsub.f32 1.0, %v975
  %v977 = vmul.f32 %v974, %v976
  %v978 = vadd.f32 %v974, %v977
  %vm979 = vweird.f32 %v972
  %vm980 = vweird.f32 %v974
  %vm981 = vmor %vm979, %vm980
  %v982 = vsel %vm981, %v974, %v978
  %v983 = vand.u32 2147483647, %v972
  %vm984 = vcmp.eq.f32.partialorder %v983, 8.507059e+37
  %v985 = vand.u32 %v972, 2147483648
  %v986 = vor.u32 1.1754944e-38, %v985
  %v987 = vsel %vm984, %v986, %v982
  %v988 = vmul.f32 1.0, %v987
  %v989 = vrcp.pop %v973
  %v990 = vmul.f32 %v973, %v989
  %v991 = vsub.f32 1.0, %v990
  %v992 = vmul.f32 %v989, %v991
  %v993 = vadd.f32 %v989, %v992
  %vm994 = vweird.f32 %v973
  %vm995 = vweird.f32 %v989
  %vm996 = vmor %vm994, %vm995
  %v997 = vsel %vm996, %v989, %v993
  %v998 = vand.u32 2147483647, %v973
  %vm999 = vcmp.eq.f32.partialorder %v998, 8.507059e+37
  %v1000 = vand.u32 %v973, 2147483648
  %v1001 = vor.u32 1.1754944e-38, %v1000
  %v1002 = vsel %vm999, %v1001, %v997
  %v1003 = vmul.f32 1.0, %v1002
  %v1004 = vsel %vm40, %v964, %v988
  %v1005 = vsel %vm41, %v965, %v1003
  %1007 = vrot.lane.b32.xlu0 %v908, 64
  %v1008 = vpop.permute.xlu0 %1007
  %v1010 = vmul.f32 %v1004, %v1008
  %v1011 = vmul.f32 %v1004, %v1005
  %1013 = vrot.lane.b32.xlu0 %v1011, 64
  %v1014 = vpop.permute.xlu0 %1013
  %v1016 = vadd.f32 %v1010, %v1014
  %v1017 = vtanh.pop %v1016
  %v1018 = vmul.f32 %v1005, %v1017
  %v1019 = vmul.u32 %v34, 7
  %v1020 = vadd.s32 %v33, %v1019
  %vm1021 = vcmp.lt.s32.totalorder %v1020, %v29
  %1023 = vrot.lane.b32.xlu0 %v1018, 64
  %v1024 = vpop.permute.xlu0 %1023
  %v1026 = vsel %vm1021, %v1024, 0.0
  %s1027 = scalar_lea.vmem [#allocation2], 56
  %1028 = vst.msk [vmem:[%s1027] sm:$0xff] %vm173, %v1026
  %1030 = vrot.lane.b32.xlu0 %v1026, 96
  %v1031 = vpop.permute.xlu0 %1030
  %1033 = vst.msk [vmem:[#allocation3] sm:$0xff] %vm173, %v1031
  %v1034 = vld [vmem:[%s5] sm:$0xff]
  %v1035 = vld [vmem:[%s5 + $0x8] sm:$0xff]
  %v1036 = vld [vmem:[%s5 + $0x10] sm:$0xff]
  %v1037 = vld [vmem:[%s5 + $0x18] sm:$0xff]
  %v1038 = vld [vmem:[%s5 + $0x20] sm:$0xff]
  %v1039 = vld [vmem:[%s5 + $0x28] sm:$0xff]
  %v1040 = vld [vmem:[%s5 + $0x30] sm:$0xff]
  %v1041 = vld [vmem:[%s5 + $0x38] sm:$0xff]
  %v1042 = vld [vmem:[#allocation2] sm:$0xff]
  %v1043 = vld [vmem:[#allocation2 + $0x8] sm:$0xff]
  %v1044 = vld [vmem:[#allocation2 + $0x10] sm:$0xff]
  %v1045 = vld [vmem:[#allocation2 + $0x18] sm:$0xff]
  %v1046 = vld [vmem:[#allocation2 + $0x20] sm:$0xff]
  %v1047 = vld [vmem:[#allocation2 + $0x28] sm:$0xff]
  %v1048 = vld [vmem:[#allocation2 + $0x30] sm:$0xff]
  %v1049 = vld [vmem:[#allocation2 + $0x38] sm:$0xff]
  %v1050 = vld [vmem:[#allocation3] sm:$0xff]
  %v1051 = vld [vmem:[#allocation3 + $0x8] sm:$0xff]
  %v1052 = vld [vmem:[#allocation3 + $0x10] sm:$0xff]
  %v1053 = vld [vmem:[#allocation3 + $0x18] sm:$0xff]
  %v1054 = vld [vmem:[#allocation3 + $0x20] sm:$0xff]
  %v1055 = vld [vmem:[#allocation3 + $0x28] sm:$0xff]
  %v1056 = vld [vmem:[#allocation3 + $0x30] sm:$0xff]
  %v1057 = vld [vmem:[#allocation3 + $0x38] sm:$0xff]
  %v1059 = vsel %vm173, %v1050, 0
  %v1062 = vsel %vm173, %v1051, 0
  %v1065 = vsel %vm173, %v1052, 0
  %v1068 = vsel %vm173, %v1053, 0
  %v1071 = vsel %vm173, %v1054, 0
  %v1074 = vsel %vm173, %v1055, 0
  %v1077 = vsel %vm173, %v1056, 0
  %v1080 = vsel %vm173, %v1057, 0
  %1082 = vmatpush.msra.mxu0 0.0
  %1083 = vmatpush.msra.mxu0 0.0
  %1084 = vmatpush.msra.mxu0 0.0
  %1085 = vmatpush.msra.mxu0 0.0
  %1086 = vmatpush.msra.mxu0 0.0
  %1087 = vmatpush.msra.mxu0 0.0
  %1088 = vmatpush.msra.mxu0 0.0
  %1089 = vmatpush.msra.mxu0 0.0
  %1090 = vmatpush.msra.mxu0 0.0
  %1091 = vmatpush.msra.mxu0 0.0
  %1092 = vmatpush.msra.mxu0 0.0
  %1093 = vmatpush.msra.mxu0 0.0
  %1094 = vmatpush.msra.mxu0 %v1041
  %1095 = vmatpush.msra.mxu0 %v1040
  %1096 = vmatpush.msra.mxu0 %v1039
  %1097 = vmatpush.msra.mxu0 %v1038
  %1098 = vmatmul.f32.gmra.mxu0 %v1059
  %v1099 = vpop.f32.mrf.mxu0
  %v1100 = vadd.f32 0.0, %v1099
  %1101 = vmatmul.f32.gmra.mxu0 %v1062
  %v1102 = vpop.f32.mrf.mxu0
  %v1103 = vadd.f32 0.0, %v1102
  %1104 = vmatmul.f32.gmra.mxu0 %v1065
  %v1105 = vpop.f32.mrf.mxu0
  %v1106 = vadd.f32 0.0, %v1105
  %1107 = vmatmul.f32.gmra.mxu0 %v1068
  %v1108 = vpop.f32.mrf.mxu0
  %v1109 = vadd.f32 0.0, %v1108
  %1110 = vmatmul.f32.gmra.mxu0 %v1071
  %v1111 = vpop.f32.mrf.mxu0
  %v1112 = vadd.f32 0.0, %v1111
  %1113 = vmatmul.f32.gmra.mxu0 %v1074
  %v1114 = vpop.f32.mrf.mxu0
  %v1115 = vadd.f32 0.0, %v1114
  %1116 = vmatmul.f32.gmra.mxu0 %v1077
  %v1117 = vpop.f32.mrf.mxu0
  %v1118 = vadd.f32 0.0, %v1117
  %1119 = vmatmul.f32.gmra.mxu0 %v1080
  %v1120 = vpop.f32.mrf.mxu0
  %v1121 = vadd.f32 0.0, %v1120
  %1122 = vdwg.mxu0
  %v1124 = vsel %vm173, %v1042, 0
  %v1127 = vsel %vm173, %v1043, 0
  %v1130 = vsel %vm173, %v1044, 0
  %v1133 = vsel %vm173, %v1045, 0
  %v1136 = vsel %vm173, %v1046, 0
  %v1139 = vsel %vm173, %v1047, 0
  %v1142 = vsel %vm173, %v1048, 0
  %v1145 = vsel %vm173, %v1049, 0
  %1147 = vmatpush.msra.mxu0 0.0
  %1148 = vmatpush.msra.mxu0 0.0
  %1149 = vmatpush.msra.mxu0 0.0
  %1150 = vmatpush.msra.mxu0 0.0
  %1151 = vmatpush.msra.mxu0 0.0
  %1152 = vmatpush.msra.mxu0 0.0
  %1153 = vmatpush.msra.mxu0 0.0
  %1154 = vmatpush.msra.mxu0 0.0
  %1155 = vmatpush.msra.mxu0 0.0
  %1156 = vmatpush.msra.mxu0 0.0
  %1157 = vmatpush.msra.mxu0 0.0
  %1158 = vmatpush.msra.mxu0 0.0
  %1159 = vmatpush.msra.mxu0 %v1037
  %1160 = vmatpush.msra.mxu0 %v1036
  %1161 = vmatpush.msra.mxu0 %v1035
  %1162 = vmatpush.msra.mxu0 %v1034
  %1163 = vmatmul.f32.gmra.mxu0 %v1124
  %v1164 = vpop.f32.mrf.mxu0
  %v1165 = vadd.f32 %v1100, %v1164
  %1166 = vmatmul.f32.gmra.mxu0 %v1127
  %v1167 = vpop.f32.mrf.mxu0
  %v1168 = vadd.f32 %v1103, %v1167
  %1169 = vmatmul.f32.gmra.mxu0 %v1130
  %v1170 = vpop.f32.mrf.mxu0
  %v1171 = vadd.f32 %v1106, %v1170
  %1172 = vmatmul.f32.gmra.mxu0 %v1133
  %v1173 = vpop.f32.mrf.mxu0
  %v1174 = vadd.f32 %v1109, %v1173
  %1175 = vmatmul.f32.gmra.mxu0 %v1136
  %v1176 = vpop.f32.mrf.mxu0
  %v1177 = vadd.f32 %v1112, %v1176
  %1178 = vmatmul.f32.gmra.mxu0 %v1139
  %v1179 = vpop.f32.mrf.mxu0
  %v1180 = vadd.f32 %v1115, %v1179
  %1181 = vmatmul.f32.gmra.mxu0 %v1142
  %v1182 = vpop.f32.mrf.mxu0
  %v1183 = vadd.f32 %v1118, %v1182
  %1184 = vmatmul.f32.gmra.mxu0 %v1145
  %v1185 = vpop.f32.mrf.mxu0
  %v1186 = vadd.f32 %v1121, %v1185
  %1187 = vdwg.mxu0
  %v1188 = vld [vmem:[%s6] sm:$0x1]
  %v1190 = vperm.slane %v1188, 0
  %v1192 = vadd.f32 %v1165, %v1190
  %v1193 = vadd.f32 %v1168, %v1190
  %v1194 = vadd.f32 %v1171, %v1190
  %v1195 = vadd.f32 %v1174, %v1190
  %v1196 = vadd.f32 %v1177, %v1190
  %v1197 = vadd.f32 %v1180, %v1190
  %v1198 = vadd.f32 %v1183, %v1190
  %v1199 = vadd.f32 %v1186, %v1190
  %1200 = vst [vmem:[%s7] sm:$0xff] %v1192
  %1201 = vst [vmem:[%s7 + $0x8] sm:$0xff] %v1193
  %1202 = vst [vmem:[%s7 + $0x10] sm:$0xff] %v1194
  %1203 = vst [vmem:[%s7 + $0x18] sm:$0xff] %v1195
  %1204 = vst [vmem:[%s7 + $0x20] sm:$0xff] %v1196
  %1205 = vst [vmem:[%s7 + $0x28] sm:$0xff] %v1197
  %1206 = vst [vmem:[%s7 + $0x30] sm:$0xff] %v1198
  %1207 = vst [vmem:[%s7 + $0x38] sm:$0xff] %v1199
  // Predicated region
  $region30: #{lstm_forward.1} parent=0 // pred_check
    _
  $region31: #{lstm_forward.1} parent=0 // pred_check_branch
    %1209 = sbr.rel (0) target = $region33
  $region32: #{lstm_forward.1} parent=0 // pred_region
    _
  $region33: #{lstm_forward.1} parent=0 // pred_fallthru
    _
  // Predicated region
  $region34: #{lstm_forward.1} parent=0 // pred_check
    _
  $region35: #{lstm_forward.1} parent=0 // pred_check_branch
    %1211 = sbr.rel (0) target = $region37
  $region36: #{lstm_forward.1} parent=0 // pred_region
    _
  $region37: #{lstm_forward.1} parent=0 // pred_fallthru
    _

</llo_original>
